<compile_context>
chip_gen: v5e
topology: v5e:2x2
jax: 0.10.0
libtpu: 0.0.40
codegen_flags: <defaults>
</compile_context>

<pallas_src>
import functools

import jax
import jax.numpy as jnp
import numpy as np
from jax import lax
from jax.experimental import pallas as pl
from jax.experimental.pallas import tpu as pltpu


def _bigru_kernel(H, TT, unroll, gi_ref, whh_ref, bhn_ref, out_ref, h_scr):
    """One grid step == TT timesteps for BOTH directions (fused).

    gi_ref : [TT, 2, B, 3H] bf16  x@W_ih^T + b_ih (+ b_hh for r,z); dir 0 =
                                  forward (original time), dir 1 = backward
                                  (already reverse-time ordered)
    whh_ref: [2, H, 3H]     bf16  fused recurrent weights (r|z|n along N), resident
    bhn_ref: [2, 1, H]      f32   recurrent bias of the candidate gate, resident
    out_ref: [TT, 2, B, H]  f32   dir 0 in time order, dir 1 in reverse-time order
    h_scr  : [2, B, H]      f32   carried hidden state
    """

    @pl.when(pl.program_id(0) == 0)
    def _():
        h_scr[...] = jnp.zeros_like(h_scr)

    # Hoist resident weight/bias loads out of the time loop.
    whh = whh_ref[...]                               # [2, H, 3H] bf16
    bhn = bhn_ref[...]                               # [2, 1, H]  f32

    def step(k, h):
        gi = gi_ref[k].astype(jnp.float32)           # [2, B, 3H]
        # One fused N=3H recurrent matmul per direction (batched over dir).
        gh = jnp.einsum('dbh,dhk->dbk', h.astype(jnp.bfloat16), whh,
                        preferred_element_type=jnp.float32)      # [2, B, 3H] f32
        # PyTorch GRU gate order (r, z, n); lane slices are aligned when H%128==0.
        r = jax.nn.sigmoid(gi[..., :H] + gh[..., :H])
        z = jax.nn.sigmoid(gi[..., H:2 * H] + gh[..., H:2 * H])
        n = jnp.tanh(gi[..., 2 * H:] + r * (gh[..., 2 * H:] + bhn))
        h = (1.0 - z) * n + z * h                                # [2, B, H] f32
        out_ref[k] = h.astype(out_ref.dtype)
        return h

    h_scr[...] = lax.fori_loop(0, TT, step, h_scr[...], unroll=unroll)


def _pick_time_tile(T, B, H, budget_bytes=12 << 20, cap=512):
    """Largest TT dividing T whose double-buffered streamed blocks fit the budget.

    Budget accounts for the double-buffered bf16 gi blocks and f32 output blocks
    (residents/scratch are added separately when choosing vmem_limit_bytes).
    """
    # TODO(synk): for prime/awkward T, pad T and mask instead of TT=1 fallback.
    def stream_bytes(tt):
        gi = 2 * tt * 2 * B * 3 * H * 2      # bf16 gi, double-buffered
        out = 2 * tt * 2 * B * H * 4         # f32 outputs, double-buffered
        return gi + out

    best = 1
    for tt in range(1, min(T, cap) + 1):
        if T % tt == 0 and stream_bytes(tt) <= budget_bytes:
            best = tt
    return best


def encoder_forward(tokens, params):
    """tokens: int32 [B, T].  Returns (outputs [B, T, 2H], h_n [2, B, H])."""
    # Embedding gather stays in XLA (no clean Pallas tiling for an arbitrary
    # vocab-sized gather).
    emb = jnp.take(params["embedding"], tokens, axis=0).astype(jnp.float32)  # [B,T,E]
    B, T, E = emb.shape
    H = params["w_hh_f"].shape[1]

    emb_tm = jnp.transpose(emb, (1, 0, 2))                                   # [T,B,E]

    # Hoisted input projection as a matmul-natural [T*B, E] x [E, 3H] product.
    # b_hh_r and b_hh_z are folded into the bias here; b_hh_n stays in-kernel.
    def gi_dir(x_tm, w_ih, b_ih, b_hh):
        bias = jnp.concatenate([b_ih[:2 * H] + b_hh[:2 * H], b_ih[2 * H:]])
        g = jnp.dot(x_tm.reshape(T * B, E), w_ih.T,
                    preferred_element_type=jnp.float32) + bias
        return g.reshape(T, B, 3 * H)

    gi_f = gi_dir(emb_tm, params["w_ih_f"], params["b_ih_f"], params["b_hh_f"])
    gi_b = gi_dir(emb_tm[::-1], params["w_ih_b"], params["b_ih_b"], params["b_hh_b"])
    # Packed [T, 2, B, 3H] bf16; backward direction is already reverse-time so
    # the kernel reads both directions at the same local index (no per-step copy).
    gi = jnp.stack([gi_f, gi_b], axis=1).astype(jnp.bfloat16)

    # Fused recurrent weights: [2, H, 3H] bf16 (one N=3H matmul per direction);
    # column blocks are (r | z | n), matching h @ W_hh^T.
    whh = jnp.stack([params["w_hh_f"].T, params["w_hh_b"].T], axis=0)
    whh = whh.astype(jnp.bfloat16)                                          # [2,H,3H]
    # Only the candidate-gate recurrent bias stays in-kernel (multiplied by r).
    bhn = jnp.stack([params["b_hh_f"][2 * H:], params["b_hh_b"][2 * H:]], axis=0)
    bhn = bhn.reshape(2, 1, H).astype(jnp.float32)                          # [2,1,H]

    TT = _pick_time_tile(T, B, H)
    Tb = T // TT
    unroll = TT if TT <= 8 else 4        # bounded unroll at production TT

    kernel = functools.partial(_bigru_kernel, H, TT, unroll)

    # Grid-invariant weights/biases: untiled whole-array VMEM residents
    # (single-buffered, no double-buffer DMA waste).
    resident = pl.BlockSpec(memory_space=pltpu.MemorySpace.VMEM)

    grid_spec = pltpu.PrefetchScalarGridSpec(
        num_scalar_prefetch=0,
        grid=(Tb,),
        in_specs=[
            pl.BlockSpec((TT, 2, B, 3 * H), lambda i: (i, 0, 0, 0)),   # gi
            resident,                                                  # whh
            resident,                                                  # bhn
        ],
        out_specs=pl.BlockSpec((TT, 2, B, H), lambda i: (i, 0, 0, 0)),
        scratch_shapes=[pltpu.VMEM((2, B, H), jnp.float32)],
    )

    # Explicit VMEM sizing: streamed (double-buffered) blocks + residents + scratch.
    stream_bytes = 2 * TT * 2 * B * 3 * H * 2 + 2 * TT * 2 * B * H * 4
    resident_bytes = 2 * H * 3 * H * 2 + 2 * H * 4 + 2 * B * H * 4
    vmem_limit = int(min(100 << 20,
                         max(16 << 20, 2 * (stream_bytes + resident_bytes))))

    out = pl.pallas_call(
        kernel,
        out_shape=jax.ShapeDtypeStruct((T, 2, B, H), jnp.float32),
        grid_spec=grid_spec,
        compiler_params=pltpu.CompilerParams(
            dimension_semantics=("arbitrary",),      # time recurrence is sequential
            vmem_limit_bytes=vmem_limit),
    )(gi, whh, bhn)

    # out[:, 0]: forward hidden in original time order.
    # out[:, 1]: backward hidden in reverse time order -> flip once here.
    out_f = out[:, 0]                                   # [T, B, H]
    out_b = out[::-1, 1]                                # [T, B, H], original time order
    outputs = jnp.transpose(jnp.concatenate([out_f, out_b], axis=-1), (1, 0, 2))
    h_n = out[-1]                                       # [2, B, H]: (fwd @ T-1, bwd final)
    return outputs, h_n


# ---------------- pure-JAX reference (for correctness check) ----------------
def encoder_forward_ref(tokens, params):
    emb = jnp.take(params["embedding"], tokens, axis=0)   # [B, T, E]
    H = params["w_hh_f"].shape[1]

    def cell(x, h, w_ih, w_hh, b_ih, b_hh):
        gi = x @ w_ih.T + b_ih
        gh = h @ w_hh.T + b_hh
        r = jax.nn.sigmoid(gi[:, :H] + gh[:, :H])
        z = jax.nn.sigmoid(gi[:, H:2 * H] + gh[:, H:2 * H])
        n = jnp.tanh(gi[:, 2 * H:] + r * gh[:, 2 * H:])
        return (1.0 - z) * n + z * h

    def run(x_tm, w_ih, w_hh, b_ih, b_hh):
        def step(h, x):
            h_new = cell(x, h, w_ih, w_hh, b_ih, b_hh)
            return h_new, h_new
        h0 = jnp.zeros((x_tm.shape[1], H), jnp.float32)
        h_last, outs = jax.lax.scan(step, h0, x_tm)
        return outs, h_last

    x_tm = jnp.transpose(emb, (1, 0, 2))
    out_f, h_f = run(x_tm, params["w_ih_f"], params["w_hh_f"],
                     params["b_ih_f"], params["b_hh_f"])
    out_b_rev, h_b = run(x_tm[::-1], params["w_ih_b"], params["w_hh_b"],
                         params["b_ih_b"], params["b_hh_b"])
    out_b = out_b_rev[::-1]
    outputs = jnp.transpose(jnp.concatenate([out_f, out_b], axis=-1), (1, 0, 2))
    h_n = jnp.stack([h_f, h_b], axis=0)
    return outputs, h_n


def init_params(key, input_size, hidden_size, embedding_size):
    ks = jax.random.split(key, 10)
    H, E, V = hidden_size, embedding_size, input_size
    s = 1.0 / np.sqrt(H)
    u = lambda k, shape: jax.random.uniform(k, shape, jnp.float32, -s, s)
    return {
        "embedding": jax.random.normal(ks[0], (V, E), jnp.float32),
        "w_ih_f": u(ks[1], (3 * H, E)), "w_hh_f": u(ks[2], (3 * H, H)),
        "b_ih_f": u(ks[3], (3 * H,)),  "b_hh_f": u(ks[4], (3 * H,)),
        "w_ih_b": u(ks[5], (3 * H, E)), "w_hh_b": u(ks[6], (3 * H, H)),
        "b_ih_b": u(ks[7], (3 * H,)),  "b_hh_b": u(ks[8], (3 * H,)),
    }


if __name__ == "__main__":
    B, T = 2, 8
    input_size, hidden_size, embedding_size = 50, 32, 32

    key = jax.random.PRNGKey(0)
    k_tok, k_par = jax.random.split(key)
    params = init_params(k_par, input_size, hidden_size, embedding_size)
    tokens = jax.random.randint(k_tok, (B, T), 0, input_size, dtype=jnp.int32)

    outputs, h_n = jax.jit(encoder_forward)(tokens, params)
    jax.block_until_ready((outputs, h_n))

    ref_out, ref_hn = encoder_forward_ref(tokens, params)
    # Looser tolerance: gi streaming and the recurrent matmul operands are bf16
    # (accumulation and gating stay f32).
    np.testing.assert_allclose(np.asarray(outputs), np.asarray(ref_out),
                               atol=4e-2, rtol=2e-2)
    np.testing.assert_allclose(np.asarray(h_n), np.asarray(ref_hn),
                               atol=4e-2, rtol=2e-2)

    assert outputs.shape == (B, T, 2 * hidden_size)
    assert h_n.shape == (2, B, hidden_size)
    print("KERNEL_OK")
</pallas_src>

<mosaic_0001>
module attributes {stable_mosaic.version = 11 : i64} {
  func.func @_bigru_kernel(%arg0: i32, %arg1: memref<8x2x2x96xbf16, #tpu.memory_space<vmem>>, %arg2: memref<2x32x96xbf16, #tpu.memory_space<vmem>>, %arg3: memref<2x1x32xf32, #tpu.memory_space<vmem>>, %arg4: memref<8x2x2x32xf32, #tpu.memory_space<vmem>>, %arg5: memref<2x2x32xf32, #tpu.memory_space<vmem>>) attributes {dimension_semantics = [#tpu.dimension_semantics<arbitrary>], iteration_bounds = array<i64: 1>, scalar_prefetch = 0 : i64, scratch_operands = 1 : i64, tpu.core_type = #tpu.core_type<tc>, window_params = [{transform_indices = @transform_0, window_bounds = array<i64: 8, 2, 2, 96>}, {pipeline_mode = #tpu.pipeline_mode<synchronous>, transform_indices = @transform_1, window_bounds = array<i64: 2, 32, 96>}, {pipeline_mode = #tpu.pipeline_mode<synchronous>, transform_indices = @transform_2, window_bounds = array<i64: 2, 1, 32>}, {transform_indices = @transform_3, window_bounds = array<i64: 8, 2, 2, 32>}]} {
    %c0_i32 = arith.constant 0 : i32
    %0 = arith.cmpi eq, %arg0, %c0_i32 : i32
    %1 = arith.extui %0 : i1 to i32
    %c0_i32_0 = arith.constant 0 : i32
    %2 = arith.cmpi ne, %1, %c0_i32_0 : i32
    scf.if %2 {
      %cst_92 = arith.constant 0.000000e+00 : f32
      %311 = vector.broadcast %cst_92 : f32 to vector<2x2x32xf32>
      %c0_93 = arith.constant 0 : index
      %c0_94 = arith.constant 0 : index
      %c0_95 = arith.constant 0 : index
      %312 = vector.load %arg5[%c0_93, %c0_94, %c0_95] : memref<2x2x32xf32, #tpu.memory_space<vmem>>, vector<2x2x32xf32>
      tpu.vector_store %arg5[%c0_93, %c0_94, %c0_95], %311 {strides = array<i32>} : memref<2x2x32xf32, #tpu.memory_space<vmem>>, vector<2x2x32xf32>,
    } else {
    }
    %c0 = arith.constant 0 : index
    %c0_1 = arith.constant 0 : index
    %c0_2 = arith.constant 0 : index
    %3 = vector.load %arg2[%c0, %c0_1, %c0_2] : memref<2x32x96xbf16, #tpu.memory_space<vmem>>, vector<2x32x96xbf16>
    %c0_3 = arith.constant 0 : index
    %c0_4 = arith.constant 0 : index
    %c0_5 = arith.constant 0 : index
    %4 = vector.load %arg3[%c0_3, %c0_4, %c0_5] : memref<2x1x32xf32, #tpu.memory_space<vmem>>, vector<2x1x32xf32>
    %c0_6 = arith.constant 0 : index
    %c0_7 = arith.constant 0 : index
    %c0_8 = arith.constant 0 : index
    %5 = vector.load %arg5[%c0_6, %c0_7, %c0_8] : memref<2x2x32xf32, #tpu.memory_space<vmem>>, vector<2x2x32xf32>
    %c0_i32_9 = arith.constant 0 : i32
    %6 = arith.index_cast %c0_i32_9 : i32 to index
    %c0_10 = arith.constant 0 : index
    %c0_11 = arith.constant 0 : index
    %c0_12 = arith.constant 0 : index
    %7 = vector.load %arg1[%6, %c0_10, %c0_11, %c0_12] : memref<8x2x2x96xbf16, #tpu.memory_space<vmem>>, vector<1x2x2x96xbf16>
    %8 = vector.shape_cast %7 : vector<1x2x2x96xbf16> to vector<2x2x96xbf16>
    %9 = arith.extf %8 : vector<2x2x96xbf16> to vector<2x2x96xf32>
    %10 = arith.truncf %5 : vector<2x2x32xf32> to vector<2x2x32xbf16>
    "tpu.trace_start"() <{level = 10 : i32, message = "dbh,dhk->dbk"}> : () -> ()
    %cst = arith.constant dense<0.000000e+00> : vector<2x2x96xf32>
    %11 = tpu.matmul %10, %3, %cst {dimension_numbers = #tpu.dot_dimension_numbers<[2], [1], [1], [2], [0, 0, 0, 1, 1, 2], [0], [0]>} : vector<2x2x32xbf16>, vector<2x32x96xbf16>, vector<2x2x96xf32> -> vector<2x2x96xf32>
    "tpu.trace_stop"() : () -> ()
    %12 = vector.extract_strided_slice %9 {offsets = [0, 0, 0], sizes = [2, 2, 32], strides = [1, 1, 1]} : vector<2x2x96xf32> to vector<2x2x32xf32>
    %13 = vector.extract_strided_slice %11 {offsets = [0, 0, 0], sizes = [2, 2, 32], strides = [1, 1, 1]} : vector<2x2x96xf32> to vector<2x2x32xf32>
    %14 = arith.addf %12, %13 : vector<2x2x32xf32>
    %15 = arith.negf %14 : vector<2x2x32xf32>
    %16 = math.exp %15 : vector<2x2x32xf32>
    %cst_13 = arith.constant 1.000000e+00 : f32
    %17 = vector.broadcast %cst_13 : f32 to vector<2x2x32xf32>
    %18 = arith.addf %17, %16 : vector<2x2x32xf32>
    %19 = arith.divf %17, %18 : vector<2x2x32xf32>
    %20 = vector.extract_strided_slice %9 {offsets = [0, 0, 32], sizes = [2, 2, 32], strides = [1, 1, 1]} : vector<2x2x96xf32> to vector<2x2x32xf32>
    %21 = vector.extract_strided_slice %11 {offsets = [0, 0, 32], sizes = [2, 2, 32], strides = [1, 1, 1]} : vector<2x2x96xf32> to vector<2x2x32xf32>
    %22 = arith.addf %20, %21 : vector<2x2x32xf32>
    %23 = arith.negf %22 : vector<2x2x32xf32>
    %24 = math.exp %23 : vector<2x2x32xf32>
    %cst_14 = arith.constant 1.000000e+00 : f32
    %25 = vector.broadcast %cst_14 : f32 to vector<2x2x32xf32>
    %26 = arith.addf %25, %24 : vector<2x2x32xf32>
    %27 = arith.divf %25, %26 : vector<2x2x32xf32>
    %28 = vector.extract_strided_slice %9 {offsets = [0, 0, 64], sizes = [2, 2, 32], strides = [1, 1, 1]} : vector<2x2x96xf32> to vector<2x2x32xf32>
    %29 = vector.extract_strided_slice %11 {offsets = [0, 0, 64], sizes = [2, 2, 32], strides = [1, 1, 1]} : vector<2x2x96xf32> to vector<2x2x32xf32>
    %30 = vector.broadcast %4 : vector<2x1x32xf32> to vector<2x2x32xf32>
    %31 = arith.addf %29, %30 : vector<2x2x32xf32>
    %32 = arith.mulf %19, %31 : vector<2x2x32xf32>
    %33 = arith.addf %28, %32 : vector<2x2x32xf32>
    %34 = math.tanh %33 : vector<2x2x32xf32>
    %cst_15 = arith.constant 1.000000e+00 : f32
    %35 = vector.broadcast %cst_15 : f32 to vector<2x2x32xf32>
    %36 = arith.subf %35, %27 : vector<2x2x32xf32>
    %37 = arith.mulf %36, %34 : vector<2x2x32xf32>
    %38 = arith.mulf %27, %5 : vector<2x2x32xf32>
    %39 = arith.addf %37, %38 : vector<2x2x32xf32>
    %40 = arith.index_cast %c0_i32_9 : i32 to index
    %c0_16 = arith.constant 0 : index
    %c0_17 = arith.constant 0 : index
    %c0_18 = arith.constant 0 : index
    %41 = vector.load %arg4[%40, %c0_16, %c0_17, %c0_18] : memref<8x2x2x32xf32, #tpu.memory_space<vmem>>, vector<1x2x2x32xf32>
    %42 = vector.shape_cast %41 : vector<1x2x2x32xf32> to vector<2x2x32xf32>
    %43 = vector.shape_cast %39 : vector<2x2x32xf32> to vector<1x2x2x32xf32>
    tpu.vector_store %arg4[%40, %c0_16, %c0_17, %c0_18], %43 {strides = array<i32>} : memref<8x2x2x32xf32, #tpu.memory_space<vmem>>, vector<1x2x2x32xf32>,
    %c1_i32 = arith.constant 1 : i32
    %44 = arith.index_cast %c1_i32 : i32 to index
    %c0_19 = arith.constant 0 : index
    %c0_20 = arith.constant 0 : index
    %c0_21 = arith.constant 0 : index
    %45 = vector.load %arg1[%44, %c0_19, %c0_20, %c0_21] : memref<8x2x2x96xbf16, #tpu.memory_space<vmem>>, vector<1x2x2x96xbf16>
    %46 = vector.shape_cast %45 : vector<1x2x2x96xbf16> to vector<2x2x96xbf16>
    %47 = arith.extf %46 : vector<2x2x96xbf16> to vector<2x2x96xf32>
    %48 = arith.truncf %39 : vector<2x2x32xf32> to vector<2x2x32xbf16>
    "tpu.trace_start"() <{level = 10 : i32, message = "dbh,dhk->dbk"}> : () -> ()
    %cst_22 = arith.constant dense<0.000000e+00> : vector<2x2x96xf32>
    %49 = tpu.matmul %48, %3, %cst_22 {dimension_numbers = #tpu.dot_dimension_numbers<[2], [1], [1], [2], [0, 0, 0, 1, 1, 2], [0], [0]>} : vector<2x2x32xbf16>, vector<2x32x96xbf16>, vector<2x2x96xf32> -> vector<2x2x96xf32>
    "tpu.trace_stop"() : () -> ()
    %50 = vector.extract_strided_slice %47 {offsets = [0, 0, 0], sizes = [2, 2, 32], strides = [1, 1, 1]} : vector<2x2x96xf32> to vector<2x2x32xf32>
    %51 = vector.extract_strided_slice %49 {offsets = [0, 0, 0], sizes = [2, 2, 32], strides = [1, 1, 1]} : vector<2x2x96xf32> to vector<2x2x32xf32>
    %52 = arith.addf %50, %51 : vector<2x2x32xf32>
    %53 = arith.negf %52 : vector<2x2x32xf32>
    %54 = math.exp %53 : vector<2x2x32xf32>
    %cst_23 = arith.constant 1.000000e+00 : f32
    %55 = vector.broadcast %cst_23 : f32 to vector<2x2x32xf32>
    %56 = arith.addf %55, %54 : vector<2x2x32xf32>
    %57 = arith.divf %55, %56 : vector<2x2x32xf32>
    %58 = vector.extract_strided_slice %47 {offsets = [0, 0, 32], sizes = [2, 2, 32], strides = [1, 1, 1]} : vector<2x2x96xf32> to vector<2x2x32xf32>
    %59 = vector.extract_strided_slice %49 {offsets = [0, 0, 32], sizes = [2, 2, 32], strides = [1, 1, 1]} : vector<2x2x96xf32> to vector<2x2x32xf32>
    %60 = arith.addf %58, %59 : vector<2x2x32xf32>
    %61 = arith.negf %60 : vector<2x2x32xf32>
    %62 = math.exp %61 : vector<2x2x32xf32>
    %cst_24 = arith.constant 1.000000e+00 : f32
    %63 = vector.broadcast %cst_24 : f32 to vector<2x2x32xf32>
    %64 = arith.addf %63, %62 : vector<2x2x32xf32>
    %65 = arith.divf %63, %64 : vector<2x2x32xf32>
    %66 = vector.extract_strided_slice %47 {offsets = [0, 0, 64], sizes = [2, 2, 32], strides = [1, 1, 1]} : vector<2x2x96xf32> to vector<2x2x32xf32>
    %67 = vector.extract_strided_slice %49 {offsets = [0, 0, 64], sizes = [2, 2, 32], strides = [1, 1, 1]} : vector<2x2x96xf32> to vector<2x2x32xf32>
    %68 = vector.broadcast %4 : vector<2x1x32xf32> to vector<2x2x32xf32>
    %69 = arith.addf %67, %68 : vector<2x2x32xf32>
    %70 = arith.mulf %57, %69 : vector<2x2x32xf32>
    %71 = arith.addf %66, %70 : vector<2x2x32xf32>
    %72 = math.tanh %71 : vector<2x2x32xf32>
    %cst_25 = arith.constant 1.000000e+00 : f32
    %73 = vector.broadcast %cst_25 : f32 to vector<2x2x32xf32>
    %74 = arith.subf %73, %65 : vector<2x2x32xf32>
    %75 = arith.mulf %74, %72 : vector<2x2x32xf32>
    %76 = arith.mulf %65, %39 : vector<2x2x32xf32>
    %77 = arith.addf %75, %76 : vector<2x2x32xf32>
    %78 = arith.index_cast %c1_i32 : i32 to index
    %c0_26 = arith.constant 0 : index
    %c0_27 = arith.constant 0 : index
    %c0_28 = arith.constant 0 : index
    %79 = vector.load %arg4[%78, %c0_26, %c0_27, %c0_28] : memref<8x2x2x32xf32, #tpu.memory_space<vmem>>, vector<1x2x2x32xf32>
    %80 = vector.shape_cast %79 : vector<1x2x2x32xf32> to vector<2x2x32xf32>
    %81 = vector.shape_cast %77 : vector<2x2x32xf32> to vector<1x2x2x32xf32>
    tpu.vector_store %arg4[%78, %c0_26, %c0_27, %c0_28], %81 {strides = array<i32>} : memref<8x2x2x32xf32, #tpu.memory_space<vmem>>, vector<1x2x2x32xf32>,
    %c2_i32 = arith.constant 2 : i32
    %82 = arith.index_cast %c2_i32 : i32 to index
    %c0_29 = arith.constant 0 : index
    %c0_30 = arith.constant 0 : index
    %c0_31 = arith.constant 0 : index
    %83 = vector.load %arg1[%82, %c0_29, %c0_30, %c0_31] : memref<8x2x2x96xbf16, #tpu.memory_space<vmem>>, vector<1x2x2x96xbf16>
    %84 = vector.shape_cast %83 : vector<1x2x2x96xbf16> to vector<2x2x96xbf16>
    %85 = arith.extf %84 : vector<2x2x96xbf16> to vector<2x2x96xf32>
    %86 = arith.truncf %77 : vector<2x2x32xf32> to vector<2x2x32xbf16>
    "tpu.trace_start"() <{level = 10 : i32, message = "dbh,dhk->dbk"}> : () -> ()
    %cst_32 = arith.constant dense<0.000000e+00> : vector<2x2x96xf32>
    %87 = tpu.matmul %86, %3, %cst_32 {dimension_numbers = #tpu.dot_dimension_numbers<[2], [1], [1], [2], [0, 0, 0, 1, 1, 2], [0], [0]>} : vector<2x2x32xbf16>, vector<2x32x96xbf16>, vector<2x2x96xf32> -> vector<2x2x96xf32>
    "tpu.trace_stop"() : () -> ()
    %88 = vector.extract_strided_slice %85 {offsets = [0, 0, 0], sizes = [2, 2, 32], strides = [1, 1, 1]} : vector<2x2x96xf32> to vector<2x2x32xf32>
    %89 = vector.extract_strided_slice %87 {offsets = [0, 0, 0], sizes = [2, 2, 32], strides = [1, 1, 1]} : vector<2x2x96xf32> to vector<2x2x32xf32>
    %90 = arith.addf %88, %89 : vector<2x2x32xf32>
    %91 = arith.negf %90 : vector<2x2x32xf32>
    %92 = math.exp %91 : vector<2x2x32xf32>
    %cst_33 = arith.constant 1.000000e+00 : f32
    %93 = vector.broadcast %cst_33 : f32 to vector<2x2x32xf32>
    %94 = arith.addf %93, %92 : vector<2x2x32xf32>
    %95 = arith.divf %93, %94 : vector<2x2x32xf32>
    %96 = vector.extract_strided_slice %85 {offsets = [0, 0, 32], sizes = [2, 2, 32], strides = [1, 1, 1]} : vector<2x2x96xf32> to vector<2x2x32xf32>
    %97 = vector.extract_strided_slice %87 {offsets = [0, 0, 32], sizes = [2, 2, 32], strides = [1, 1, 1]} : vector<2x2x96xf32> to vector<2x2x32xf32>
    %98 = arith.addf %96, %97 : vector<2x2x32xf32>
    %99 = arith.negf %98 : vector<2x2x32xf32>
    %100 = math.exp %99 : vector<2x2x32xf32>
    %cst_34 = arith.constant 1.000000e+00 : f32
    %101 = vector.broadcast %cst_34 : f32 to vector<2x2x32xf32>
    %102 = arith.addf %101, %100 : vector<2x2x32xf32>
    %103 = arith.divf %101, %102 : vector<2x2x32xf32>
    %104 = vector.extract_strided_slice %85 {offsets = [0, 0, 64], sizes = [2, 2, 32], strides = [1, 1, 1]} : vector<2x2x96xf32> to vector<2x2x32xf32>
    %105 = vector.extract_strided_slice %87 {offsets = [0, 0, 64], sizes = [2, 2, 32], strides = [1, 1, 1]} : vector<2x2x96xf32> to vector<2x2x32xf32>
    %106 = vector.broadcast %4 : vector<2x1x32xf32> to vector<2x2x32xf32>
    %107 = arith.addf %105, %106 : vector<2x2x32xf32>
    %108 = arith.mulf %95, %107 : vector<2x2x32xf32>
    %109 = arith.addf %104, %108 : vector<2x2x32xf32>
    %110 = math.tanh %109 : vector<2x2x32xf32>
    %cst_35 = arith.constant 1.000000e+00 : f32
    %111 = vector.broadcast %cst_35 : f32 to vector<2x2x32xf32>
    %112 = arith.subf %111, %103 : vector<2x2x32xf32>
    %113 = arith.mulf %112, %110 : vector<2x2x32xf32>
    %114 = arith.mulf %103, %77 : vector<2x2x32xf32>
    %115 = arith.addf %113, %114 : vector<2x2x32xf32>
    %116 = arith.index_cast %c2_i32 : i32 to index
    %c0_36 = arith.constant 0 : index
    %c0_37 = arith.constant 0 : index
    %c0_38 = arith.constant 0 : index
    %117 = vector.load %arg4[%116, %c0_36, %c0_37, %c0_38] : memref<8x2x2x32xf32, #tpu.memory_space<vmem>>, vector<1x2x2x32xf32>
    %118 = vector.shape_cast %117 : vector<1x2x2x32xf32> to vector<2x2x32xf32>
    %119 = vector.shape_cast %115 : vector<2x2x32xf32> to vector<1x2x2x32xf32>
    tpu.vector_store %arg4[%116, %c0_36, %c0_37, %c0_38], %119 {strides = array<i32>} : memref<8x2x2x32xf32, #tpu.memory_space<vmem>>, vector<1x2x2x32xf32>,
    %c3_i32 = arith.constant 3 : i32
    %120 = arith.index_cast %c3_i32 : i32 to index
    %c0_39 = arith.constant 0 : index
    %c0_40 = arith.constant 0 : index
    %c0_41 = arith.constant 0 : index
    %121 = vector.load %arg1[%120, %c0_39, %c0_40, %c0_41] : memref<8x2x2x96xbf16, #tpu.memory_space<vmem>>, vector<1x2x2x96xbf16>
    %122 = vector.shape_cast %121 : vector<1x2x2x96xbf16> to vector<2x2x96xbf16>
    %123 = arith.extf %122 : vector<2x2x96xbf16> to vector<2x2x96xf32>
    %124 = arith.truncf %115 : vector<2x2x32xf32> to vector<2x2x32xbf16>
    "tpu.trace_start"() <{level = 10 : i32, message = "dbh,dhk->dbk"}> : () -> ()
    %cst_42 = arith.constant dense<0.000000e+00> : vector<2x2x96xf32>
    %125 = tpu.matmul %124, %3, %cst_42 {dimension_numbers = #tpu.dot_dimension_numbers<[2], [1], [1], [2], [0, 0, 0, 1, 1, 2], [0], [0]>} : vector<2x2x32xbf16>, vector<2x32x96xbf16>, vector<2x2x96xf32> -> vector<2x2x96xf32>
    "tpu.trace_stop"() : () -> ()
    %126 = vector.extract_strided_slice %123 {offsets = [0, 0, 0], sizes = [2, 2, 32], strides = [1, 1, 1]} : vector<2x2x96xf32> to vector<2x2x32xf32>
    %127 = vector.extract_strided_slice %125 {offsets = [0, 0, 0], sizes = [2, 2, 32], strides = [1, 1, 1]} : vector<2x2x96xf32> to vector<2x2x32xf32>
    %128 = arith.addf %126, %127 : vector<2x2x32xf32>
    %129 = arith.negf %128 : vector<2x2x32xf32>
    %130 = math.exp %129 : vector<2x2x32xf32>
    %cst_43 = arith.constant 1.000000e+00 : f32
    %131 = vector.broadcast %cst_43 : f32 to vector<2x2x32xf32>
    %132 = arith.addf %131, %130 : vector<2x2x32xf32>
    %133 = arith.divf %131, %132 : vector<2x2x32xf32>
    %134 = vector.extract_strided_slice %123 {offsets = [0, 0, 32], sizes = [2, 2, 32], strides = [1, 1, 1]} : vector<2x2x96xf32> to vector<2x2x32xf32>
    %135 = vector.extract_strided_slice %125 {offsets = [0, 0, 32], sizes = [2, 2, 32], strides = [1, 1, 1]} : vector<2x2x96xf32> to vector<2x2x32xf32>
    %136 = arith.addf %134, %135 : vector<2x2x32xf32>
    %137 = arith.negf %136 : vector<2x2x32xf32>
    %138 = math.exp %137 : vector<2x2x32xf32>
    %cst_44 = arith.constant 1.000000e+00 : f32
    %139 = vector.broadcast %cst_44 : f32 to vector<2x2x32xf32>
    %140 = arith.addf %139, %138 : vector<2x2x32xf32>
    %141 = arith.divf %139, %140 : vector<2x2x32xf32>
    %142 = vector.extract_strided_slice %123 {offsets = [0, 0, 64], sizes = [2, 2, 32], strides = [1, 1, 1]} : vector<2x2x96xf32> to vector<2x2x32xf32>
    %143 = vector.extract_strided_slice %125 {offsets = [0, 0, 64], sizes = [2, 2, 32], strides = [1, 1, 1]} : vector<2x2x96xf32> to vector<2x2x32xf32>
    %144 = vector.broadcast %4 : vector<2x1x32xf32> to vector<2x2x32xf32>
    %145 = arith.addf %143, %144 : vector<2x2x32xf32>
    %146 = arith.mulf %133, %145 : vector<2x2x32xf32>
    %147 = arith.addf %142, %146 : vector<2x2x32xf32>
    %148 = math.tanh %147 : vector<2x2x32xf32>
    %cst_45 = arith.constant 1.000000e+00 : f32
    %149 = vector.broadcast %cst_45 : f32 to vector<2x2x32xf32>
    %150 = arith.subf %149, %141 : vector<2x2x32xf32>
    %151 = arith.mulf %150, %148 : vector<2x2x32xf32>
    %152 = arith.mulf %141, %115 : vector<2x2x32xf32>
    %153 = arith.addf %151, %152 : vector<2x2x32xf32>
    %154 = arith.index_cast %c3_i32 : i32 to index
    %c0_46 = arith.constant 0 : index
    %c0_47 = arith.constant 0 : index
    %c0_48 = arith.constant 0 : index
    %155 = vector.load %arg4[%154, %c0_46, %c0_47, %c0_48] : memref<8x2x2x32xf32, #tpu.memory_space<vmem>>, vector<1x2x2x32xf32>
    %156 = vector.shape_cast %155 : vector<1x2x2x32xf32> to vector<2x2x32xf32>
    %157 = vector.shape_cast %153 : vector<2x2x32xf32> to vector<1x2x2x32xf32>
    tpu.vector_store %arg4[%154, %c0_46, %c0_47, %c0_48], %157 {strides = array<i32>} : memref<8x2x2x32xf32, #tpu.memory_space<vmem>>, vector<1x2x2x32xf32>,
    %c4_i32 = arith.constant 4 : i32
    %158 = arith.index_cast %c4_i32 : i32 to index
    %c0_49 = arith.constant 0 : index
    %c0_50 = arith.constant 0 : index
    %c0_51 = arith.constant 0 : index
    %159 = vector.load %arg1[%158, %c0_49, %c0_50, %c0_51] : memref<8x2x2x96xbf16, #tpu.memory_space<vmem>>, vector<1x2x2x96xbf16>
    %160 = vector.shape_cast %159 : vector<1x2x2x96xbf16> to vector<2x2x96xbf16>
    %161 = arith.extf %160 : vector<2x2x96xbf16> to vector<2x2x96xf32>
    %162 = arith.truncf %153 : vector<2x2x32xf32> to vector<2x2x32xbf16>
    "tpu.trace_start"() <{level = 10 : i32, message = "dbh,dhk->dbk"}> : () -> ()
    %cst_52 = arith.constant dense<0.000000e+00> : vector<2x2x96xf32>
    %163 = tpu.matmul %162, %3, %cst_52 {dimension_numbers = #tpu.dot_dimension_numbers<[2], [1], [1], [2], [0, 0, 0, 1, 1, 2], [0], [0]>} : vector<2x2x32xbf16>, vector<2x32x96xbf16>, vector<2x2x96xf32> -> vector<2x2x96xf32>
    "tpu.trace_stop"() : () -> ()
    %164 = vector.extract_strided_slice %161 {offsets = [0, 0, 0], sizes = [2, 2, 32], strides = [1, 1, 1]} : vector<2x2x96xf32> to vector<2x2x32xf32>
    %165 = vector.extract_strided_slice %163 {offsets = [0, 0, 0], sizes = [2, 2, 32], strides = [1, 1, 1]} : vector<2x2x96xf32> to vector<2x2x32xf32>
    %166 = arith.addf %164, %165 : vector<2x2x32xf32>
    %167 = arith.negf %166 : vector<2x2x32xf32>
    %168 = math.exp %167 : vector<2x2x32xf32>
    %cst_53 = arith.constant 1.000000e+00 : f32
    %169 = vector.broadcast %cst_53 : f32 to vector<2x2x32xf32>
    %170 = arith.addf %169, %168 : vector<2x2x32xf32>
    %171 = arith.divf %169, %170 : vector<2x2x32xf32>
    %172 = vector.extract_strided_slice %161 {offsets = [0, 0, 32], sizes = [2, 2, 32], strides = [1, 1, 1]} : vector<2x2x96xf32> to vector<2x2x32xf32>
    %173 = vector.extract_strided_slice %163 {offsets = [0, 0, 32], sizes = [2, 2, 32], strides = [1, 1, 1]} : vector<2x2x96xf32> to vector<2x2x32xf32>
    %174 = arith.addf %172, %173 : vector<2x2x32xf32>
    %175 = arith.negf %174 : vector<2x2x32xf32>
    %176 = math.exp %175 : vector<2x2x32xf32>
    %cst_54 = arith.constant 1.000000e+00 : f32
    %177 = vector.broadcast %cst_54 : f32 to vector<2x2x32xf32>
    %178 = arith.addf %177, %176 : vector<2x2x32xf32>
    %179 = arith.divf %177, %178 : vector<2x2x32xf32>
    %180 = vector.extract_strided_slice %161 {offsets = [0, 0, 64], sizes = [2, 2, 32], strides = [1, 1, 1]} : vector<2x2x96xf32> to vector<2x2x32xf32>
    %181 = vector.extract_strided_slice %163 {offsets = [0, 0, 64], sizes = [2, 2, 32], strides = [1, 1, 1]} : vector<2x2x96xf32> to vector<2x2x32xf32>
    %182 = vector.broadcast %4 : vector<2x1x32xf32> to vector<2x2x32xf32>
    %183 = arith.addf %181, %182 : vector<2x2x32xf32>
    %184 = arith.mulf %171, %183 : vector<2x2x32xf32>
    %185 = arith.addf %180, %184 : vector<2x2x32xf32>
    %186 = math.tanh %185 : vector<2x2x32xf32>
    %cst_55 = arith.constant 1.000000e+00 : f32
    %187 = vector.broadcast %cst_55 : f32 to vector<2x2x32xf32>
    %188 = arith.subf %187, %179 : vector<2x2x32xf32>
    %189 = arith.mulf %188, %186 : vector<2x2x32xf32>
    %190 = arith.mulf %179, %153 : vector<2x2x32xf32>
    %191 = arith.addf %189, %190 : vector<2x2x32xf32>
    %192 = arith.index_cast %c4_i32 : i32 to index
    %c0_56 = arith.constant 0 : index
    %c0_57 = arith.constant 0 : index
    %c0_58 = arith.constant 0 : index
    %193 = vector.load %arg4[%192, %c0_56, %c0_57, %c0_58] : memref<8x2x2x32xf32, #tpu.memory_space<vmem>>, vector<1x2x2x32xf32>
    %194 = vector.shape_cast %193 : vector<1x2x2x32xf32> to vector<2x2x32xf32>
    %195 = vector.shape_cast %191 : vector<2x2x32xf32> to vector<1x2x2x32xf32>
    tpu.vector_store %arg4[%192, %c0_56, %c0_57, %c0_58], %195 {strides = array<i32>} : memref<8x2x2x32xf32, #tpu.memory_space<vmem>>, vector<1x2x2x32xf32>,
    %c5_i32 = arith.constant 5 : i32
    %196 = arith.index_cast %c5_i32 : i32 to index
    %c0_59 = arith.constant 0 : index
    %c0_60 = arith.constant 0 : index
    %c0_61 = arith.constant 0 : index
    %197 = vector.load %arg1[%196, %c0_59, %c0_60, %c0_61] : memref<8x2x2x96xbf16, #tpu.memory_space<vmem>>, vector<1x2x2x96xbf16>
    %198 = vector.shape_cast %197 : vector<1x2x2x96xbf16> to vector<2x2x96xbf16>
    %199 = arith.extf %198 : vector<2x2x96xbf16> to vector<2x2x96xf32>
    %200 = arith.truncf %191 : vector<2x2x32xf32> to vector<2x2x32xbf16>
    "tpu.trace_start"() <{level = 10 : i32, message = "dbh,dhk->dbk"}> : () -> ()
    %cst_62 = arith.constant dense<0.000000e+00> : vector<2x2x96xf32>
    %201 = tpu.matmul %200, %3, %cst_62 {dimension_numbers = #tpu.dot_dimension_numbers<[2], [1], [1], [2], [0, 0, 0, 1, 1, 2], [0], [0]>} : vector<2x2x32xbf16>, vector<2x32x96xbf16>, vector<2x2x96xf32> -> vector<2x2x96xf32>
    "tpu.trace_stop"() : () -> ()
    %202 = vector.extract_strided_slice %199 {offsets = [0, 0, 0], sizes = [2, 2, 32], strides = [1, 1, 1]} : vector<2x2x96xf32> to vector<2x2x32xf32>
    %203 = vector.extract_strided_slice %201 {offsets = [0, 0, 0], sizes = [2, 2, 32], strides = [1, 1, 1]} : vector<2x2x96xf32> to vector<2x2x32xf32>
    %204 = arith.addf %202, %203 : vector<2x2x32xf32>
    %205 = arith.negf %204 : vector<2x2x32xf32>
    %206 = math.exp %205 : vector<2x2x32xf32>
    %cst_63 = arith.constant 1.000000e+00 : f32
    %207 = vector.broadcast %cst_63 : f32 to vector<2x2x32xf32>
    %208 = arith.addf %207, %206 : vector<2x2x32xf32>
    %209 = arith.divf %207, %208 : vector<2x2x32xf32>
    %210 = vector.extract_strided_slice %199 {offsets = [0, 0, 32], sizes = [2, 2, 32], strides = [1, 1, 1]} : vector<2x2x96xf32> to vector<2x2x32xf32>
    %211 = vector.extract_strided_slice %201 {offsets = [0, 0, 32], sizes = [2, 2, 32], strides = [1, 1, 1]} : vector<2x2x96xf32> to vector<2x2x32xf32>
    %212 = arith.addf %210, %211 : vector<2x2x32xf32>
    %213 = arith.negf %212 : vector<2x2x32xf32>
    %214 = math.exp %213 : vector<2x2x32xf32>
    %cst_64 = arith.constant 1.000000e+00 : f32
    %215 = vector.broadcast %cst_64 : f32 to vector<2x2x32xf32>
    %216 = arith.addf %215, %214 : vector<2x2x32xf32>
    %217 = arith.divf %215, %216 : vector<2x2x32xf32>
    %218 = vector.extract_strided_slice %199 {offsets = [0, 0, 64], sizes = [2, 2, 32], strides = [1, 1, 1]} : vector<2x2x96xf32> to vector<2x2x32xf32>
    %219 = vector.extract_strided_slice %201 {offsets = [0, 0, 64], sizes = [2, 2, 32], strides = [1, 1, 1]} : vector<2x2x96xf32> to vector<2x2x32xf32>
    %220 = vector.broadcast %4 : vector<2x1x32xf32> to vector<2x2x32xf32>
    %221 = arith.addf %219, %220 : vector<2x2x32xf32>
    %222 = arith.mulf %209, %221 : vector<2x2x32xf32>
    %223 = arith.addf %218, %222 : vector<2x2x32xf32>
    %224 = math.tanh %223 : vector<2x2x32xf32>
    %cst_65 = arith.constant 1.000000e+00 : f32
    %225 = vector.broadcast %cst_65 : f32 to vector<2x2x32xf32>
    %226 = arith.subf %225, %217 : vector<2x2x32xf32>
    %227 = arith.mulf %226, %224 : vector<2x2x32xf32>
    %228 = arith.mulf %217, %191 : vector<2x2x32xf32>
    %229 = arith.addf %227, %228 : vector<2x2x32xf32>
    %230 = arith.index_cast %c5_i32 : i32 to index
    %c0_66 = arith.constant 0 : index
    %c0_67 = arith.constant 0 : index
    %c0_68 = arith.constant 0 : index
    %231 = vector.load %arg4[%230, %c0_66, %c0_67, %c0_68] : memref<8x2x2x32xf32, #tpu.memory_space<vmem>>, vector<1x2x2x32xf32>
    %232 = vector.shape_cast %231 : vector<1x2x2x32xf32> to vector<2x2x32xf32>
    %233 = vector.shape_cast %229 : vector<2x2x32xf32> to vector<1x2x2x32xf32>
    tpu.vector_store %arg4[%230, %c0_66, %c0_67, %c0_68], %233 {strides = array<i32>} : memref<8x2x2x32xf32, #tpu.memory_space<vmem>>, vector<1x2x2x32xf32>,
    %c6_i32 = arith.constant 6 : i32
    %234 = arith.index_cast %c6_i32 : i32 to index
    %c0_69 = arith.constant 0 : index
    %c0_70 = arith.constant 0 : index
    %c0_71 = arith.constant 0 : index
    %235 = vector.load %arg1[%234, %c0_69, %c0_70, %c0_71] : memref<8x2x2x96xbf16, #tpu.memory_space<vmem>>, vector<1x2x2x96xbf16>
    %236 = vector.shape_cast %235 : vector<1x2x2x96xbf16> to vector<2x2x96xbf16>
    %237 = arith.extf %236 : vector<2x2x96xbf16> to vector<2x2x96xf32>
    %238 = arith.truncf %229 : vector<2x2x32xf32> to vector<2x2x32xbf16>
    "tpu.trace_start"() <{level = 10 : i32, message = "dbh,dhk->dbk"}> : () -> ()
    %cst_72 = arith.constant dense<0.000000e+00> : vector<2x2x96xf32>
    %239 = tpu.matmul %238, %3, %cst_72 {dimension_numbers = #tpu.dot_dimension_numbers<[2], [1], [1], [2], [0, 0, 0, 1, 1, 2], [0], [0]>} : vector<2x2x32xbf16>, vector<2x32x96xbf16>, vector<2x2x96xf32> -> vector<2x2x96xf32>
    "tpu.trace_stop"() : () -> ()
    %240 = vector.extract_strided_slice %237 {offsets = [0, 0, 0], sizes = [2, 2, 32], strides = [1, 1, 1]} : vector<2x2x96xf32> to vector<2x2x32xf32>
    %241 = vector.extract_strided_slice %239 {offsets = [0, 0, 0], sizes = [2, 2, 32], strides = [1, 1, 1]} : vector<2x2x96xf32> to vector<2x2x32xf32>
    %242 = arith.addf %240, %241 : vector<2x2x32xf32>
    %243 = arith.negf %242 : vector<2x2x32xf32>
    %244 = math.exp %243 : vector<2x2x32xf32>
    %cst_73 = arith.constant 1.000000e+00 : f32
    %245 = vector.broadcast %cst_73 : f32 to vector<2x2x32xf32>
    %246 = arith.addf %245, %244 : vector<2x2x32xf32>
    %247 = arith.divf %245, %246 : vector<2x2x32xf32>
    %248 = vector.extract_strided_slice %237 {offsets = [0, 0, 32], sizes = [2, 2, 32], strides = [1, 1, 1]} : vector<2x2x96xf32> to vector<2x2x32xf32>
    %249 = vector.extract_strided_slice %239 {offsets = [0, 0, 32], sizes = [2, 2, 32], strides = [1, 1, 1]} : vector<2x2x96xf32> to vector<2x2x32xf32>
    %250 = arith.addf %248, %249 : vector<2x2x32xf32>
    %251 = arith.negf %250 : vector<2x2x32xf32>
    %252 = math.exp %251 : vector<2x2x32xf32>
    %cst_74 = arith.constant 1.000000e+00 : f32
    %253 = vector.broadcast %cst_74 : f32 to vector<2x2x32xf32>
    %254 = arith.addf %253, %252 : vector<2x2x32xf32>
    %255 = arith.divf %253, %254 : vector<2x2x32xf32>
    %256 = vector.extract_strided_slice %237 {offsets = [0, 0, 64], sizes = [2, 2, 32], strides = [1, 1, 1]} : vector<2x2x96xf32> to vector<2x2x32xf32>
    %257 = vector.extract_strided_slice %239 {offsets = [0, 0, 64], sizes = [2, 2, 32], strides = [1, 1, 1]} : vector<2x2x96xf32> to vector<2x2x32xf32>
    %258 = vector.broadcast %4 : vector<2x1x32xf32> to vector<2x2x32xf32>
    %259 = arith.addf %257, %258 : vector<2x2x32xf32>
    %260 = arith.mulf %247, %259 : vector<2x2x32xf32>
    %261 = arith.addf %256, %260 : vector<2x2x32xf32>
    %262 = math.tanh %261 : vector<2x2x32xf32>
    %cst_75 = arith.constant 1.000000e+00 : f32
    %263 = vector.broadcast %cst_75 : f32 to vector<2x2x32xf32>
    %264 = arith.subf %263, %255 : vector<2x2x32xf32>
    %265 = arith.mulf %264, %262 : vector<2x2x32xf32>
    %266 = arith.mulf %255, %229 : vector<2x2x32xf32>
    %267 = arith.addf %265, %266 : vector<2x2x32xf32>
    %268 = arith.index_cast %c6_i32 : i32 to index
    %c0_76 = arith.constant 0 : index
    %c0_77 = arith.constant 0 : index
    %c0_78 = arith.constant 0 : index
    %269 = vector.load %arg4[%268, %c0_76, %c0_77, %c0_78] : memref<8x2x2x32xf32, #tpu.memory_space<vmem>>, vector<1x2x2x32xf32>
    %270 = vector.shape_cast %269 : vector<1x2x2x32xf32> to vector<2x2x32xf32>
    %271 = vector.shape_cast %267 : vector<2x2x32xf32> to vector<1x2x2x32xf32>
    tpu.vector_store %arg4[%268, %c0_76, %c0_77, %c0_78], %271 {strides = array<i32>} : memref<8x2x2x32xf32, #tpu.memory_space<vmem>>, vector<1x2x2x32xf32>,
    %c7_i32 = arith.constant 7 : i32
    %272 = arith.index_cast %c7_i32 : i32 to index
    %c0_79 = arith.constant 0 : index
    %c0_80 = arith.constant 0 : index
    %c0_81 = arith.constant 0 : index
    %273 = vector.load %arg1[%272, %c0_79, %c0_80, %c0_81] : memref<8x2x2x96xbf16, #tpu.memory_space<vmem>>, vector<1x2x2x96xbf16>
    %274 = vector.shape_cast %273 : vector<1x2x2x96xbf16> to vector<2x2x96xbf16>
    %275 = arith.extf %274 : vector<2x2x96xbf16> to vector<2x2x96xf32>
    %276 = arith.truncf %267 : vector<2x2x32xf32> to vector<2x2x32xbf16>
    "tpu.trace_start"() <{level = 10 : i32, message = "dbh,dhk->dbk"}> : () -> ()
    %cst_82 = arith.constant dense<0.000000e+00> : vector<2x2x96xf32>
    %277 = tpu.matmul %276, %3, %cst_82 {dimension_numbers = #tpu.dot_dimension_numbers<[2], [1], [1], [2], [0, 0, 0, 1, 1, 2], [0], [0]>} : vector<2x2x32xbf16>, vector<2x32x96xbf16>, vector<2x2x96xf32> -> vector<2x2x96xf32>
    "tpu.trace_stop"() : () -> ()
    %278 = vector.extract_strided_slice %275 {offsets = [0, 0, 0], sizes = [2, 2, 32], strides = [1, 1, 1]} : vector<2x2x96xf32> to vector<2x2x32xf32>
    %279 = vector.extract_strided_slice %277 {offsets = [0, 0, 0], sizes = [2, 2, 32], strides = [1, 1, 1]} : vector<2x2x96xf32> to vector<2x2x32xf32>
    %280 = arith.addf %278, %279 : vector<2x2x32xf32>
    %281 = arith.negf %280 : vector<2x2x32xf32>
    %282 = math.exp %281 : vector<2x2x32xf32>
    %cst_83 = arith.constant 1.000000e+00 : f32
    %283 = vector.broadcast %cst_83 : f32 to vector<2x2x32xf32>
    %284 = arith.addf %283, %282 : vector<2x2x32xf32>
    %285 = arith.divf %283, %284 : vector<2x2x32xf32>
    %286 = vector.extract_strided_slice %275 {offsets = [0, 0, 32], sizes = [2, 2, 32], strides = [1, 1, 1]} : vector<2x2x96xf32> to vector<2x2x32xf32>
    %287 = vector.extract_strided_slice %277 {offsets = [0, 0, 32], sizes = [2, 2, 32], strides = [1, 1, 1]} : vector<2x2x96xf32> to vector<2x2x32xf32>
    %288 = arith.addf %286, %287 : vector<2x2x32xf32>
    %289 = arith.negf %288 : vector<2x2x32xf32>
    %290 = math.exp %289 : vector<2x2x32xf32>
    %cst_84 = arith.constant 1.000000e+00 : f32
    %291 = vector.broadcast %cst_84 : f32 to vector<2x2x32xf32>
    %292 = arith.addf %291, %290 : vector<2x2x32xf32>
    %293 = arith.divf %291, %292 : vector<2x2x32xf32>
    %294 = vector.extract_strided_slice %275 {offsets = [0, 0, 64], sizes = [2, 2, 32], strides = [1, 1, 1]} : vector<2x2x96xf32> to vector<2x2x32xf32>
    %295 = vector.extract_strided_slice %277 {offsets = [0, 0, 64], sizes = [2, 2, 32], strides = [1, 1, 1]} : vector<2x2x96xf32> to vector<2x2x32xf32>
    %296 = vector.broadcast %4 : vector<2x1x32xf32> to vector<2x2x32xf32>
    %297 = arith.addf %295, %296 : vector<2x2x32xf32>
    %298 = arith.mulf %285, %297 : vector<2x2x32xf32>
    %299 = arith.addf %294, %298 : vector<2x2x32xf32>
    %300 = math.tanh %299 : vector<2x2x32xf32>
    %cst_85 = arith.constant 1.000000e+00 : f32
    %301 = vector.broadcast %cst_85 : f32 to vector<2x2x32xf32>
    %302 = arith.subf %301, %293 : vector<2x2x32xf32>
    %303 = arith.mulf %302, %300 : vector<2x2x32xf32>
    %304 = arith.mulf %293, %267 : vector<2x2x32xf32>
    %305 = arith.addf %303, %304 : vector<2x2x32xf32>
    %306 = arith.index_cast %c7_i32 : i32 to index
    %c0_86 = arith.constant 0 : index
    %c0_87 = arith.constant 0 : index
    %c0_88 = arith.constant 0 : index
    %307 = vector.load %arg4[%306, %c0_86, %c0_87, %c0_88] : memref<8x2x2x32xf32, #tpu.memory_space<vmem>>, vector<1x2x2x32xf32>
    %308 = vector.shape_cast %307 : vector<1x2x2x32xf32> to vector<2x2x32xf32>
    %309 = vector.shape_cast %305 : vector<2x2x32xf32> to vector<1x2x2x32xf32>
    tpu.vector_store %arg4[%306, %c0_86, %c0_87, %c0_88], %309 {strides = array<i32>} : memref<8x2x2x32xf32, #tpu.memory_space<vmem>>, vector<1x2x2x32xf32>,
    %c8_i32 = arith.constant 8 : i32
    %c0_89 = arith.constant 0 : index
    %c0_90 = arith.constant 0 : index
    %c0_91 = arith.constant 0 : index
    %310 = vector.load %arg5[%c0_89, %c0_90, %c0_91] : memref<2x2x32xf32, #tpu.memory_space<vmem>>, vector<2x2x32xf32>
    tpu.vector_store %arg5[%c0_89, %c0_90, %c0_91], %305 {strides = array<i32>} : memref<2x2x32xf32, #tpu.memory_space<vmem>>, vector<2x2x32xf32>,
    return
  }
  func.func @transform_0(%arg0: i32) -> (i32, i32, i32, i32) {
    %c0_i32 = arith.constant 0 : i32
    %c0_i32_0 = arith.constant 0 : i32
    %c0_i32_1 = arith.constant 0 : i32
    %c0_i32_2 = arith.constant 0 : i32
    return %arg0, %c0_i32, %c0_i32_0, %c0_i32_1 : i32, i32, i32, i32
  }
  func.func @transform_1(%arg0: i32) -> (i32, i32, i32) {
    %c0_i32 = arith.constant 0 : i32
    %c0_i32_0 = arith.constant 0 : i32
    %c0_i32_1 = arith.constant 0 : i32
    %c0_i32_2 = arith.constant 0 : i32
    return %c0_i32, %c0_i32_0, %c0_i32_1 : i32, i32, i32
  }
  func.func @transform_2(%arg0: i32) -> (i32, i32, i32) {
    %c0_i32 = arith.constant 0 : i32
    %c0_i32_0 = arith.constant 0 : i32
    %c0_i32_1 = arith.constant 0 : i32
    %c0_i32_2 = arith.constant 0 : i32
    return %c0_i32, %c0_i32_0, %c0_i32_1 : i32, i32, i32
  }
  func.func @transform_3(%arg0: i32) -> (i32, i32, i32, i32) {
    %c0_i32 = arith.constant 0 : i32
    %c0_i32_0 = arith.constant 0 : i32
    %c0_i32_1 = arith.constant 0 : i32
    %c0_i32_2 = arith.constant 0 : i32
    return %arg0, %c0_i32, %c0_i32_0, %c0_i32_1 : i32, i32, i32, i32
  }
}

</mosaic_0001>

<llo_original>
// kernel: encoder_forward.1
$region0: #{encoder_forward.1}
  #allocation0 [shape = 'u32[]', space=smem, size = 0x4, offset = 0x4, fixed_abs, tag = 'smem constant byte address 0x4 - core index']
  #allocation1 [shape = 'u32[72,128]{1,0:T(1,128)}', space=vmem, size = 0x9000, scoped, tag = 'internal scratch']
  #allocation2 [shape = 'f32[2,2,32]{2,1,0:T(2,128)}', space=vmem, size = 0x800, scoped, tag = 'scratch operand']
  %s0 = inlined_call_operand.vmem [shape: bf16[8,2,2,96], index: 0, kind: input, shape index: {}]
  %s1 = inlined_call_operand.vmem [shape: bf16[2,32,96], index: 1, kind: input, shape index: {}]
  %s2 = inlined_call_operand.vmem [shape: f32[2,1,32], index: 2, kind: input, shape index: {}]
  %s3 = inlined_call_operand.vmem [shape: f32[8,2,2,32], index: 3, kind: output, shape index: {}]
  %s4 = sld [smem:[#allocation0]]
  $region26: #{encoder_forward.1} parent=0
    _
  %s6 = ssub.s32 1, %s4
  %s7 = scalar_select 0, %s6, %s4
  // Predicated region
  $region2: #{encoder_forward.1} parent=0 // pred_check
    _
  $region3: #{encoder_forward.1} parent=0 // pred_check_branch
    %9 = sbr.rel (0) target = $region5
  $region4: #{encoder_forward.1} parent=0 // pred_region
    _
  $region5: #{encoder_forward.1} parent=0 // pred_fallthru
    _
  // Predicated region
  $region6: #{encoder_forward.1} parent=0 // pred_check
    _
  $region7: #{encoder_forward.1} parent=0 // pred_check_branch
    %11 = sbr.rel (0) target = $region9
  $region8: #{encoder_forward.1} parent=0 // pred_region
    _
  $region9: #{encoder_forward.1} parent=0 // pred_fallthru
    _
  // Predicated region
  $region10: #{encoder_forward.1} parent=0 // pred_check
    _
  $region11: #{encoder_forward.1} parent=0 // pred_check_branch
    %13 = sbr.rel (0) target = $region13
  $region12: #{encoder_forward.1} parent=0 // pred_region
    _
  $region13: #{encoder_forward.1} parent=0 // pred_fallthru
    _
  %p15 = scmp.eq.s32.totalorder 0, 0
  // Predicated region
  $region14: #{encoder_forward.1} parent=0 // pred_check
    %p16 = pneg %p15
  $region15: #{encoder_forward.1} parent=0 // pred_check_branch
    %18 = sbr.rel (%p16) target = $region17
  $region16: #{encoder_forward.1} parent=0 // pred_region
    %vm19 = vcmask 254976
    %20 = vst.msk [vmem:[#allocation2] sm:$0x3] %vm19, 0.0
    %21 = vst.msk [vmem:[#allocation2 + $0x2] sm:$0x3] %vm19, 0.0
  $region17: #{encoder_forward.1} parent=0 // pred_fallthru
    _
  %v22 = vld [vmem:[%s1] sm:$0xf]
  %v23 = vld [vmem:[%s1 + $0x4] sm:$0xf]
  %v24 = vld [vmem:[%s1 + $0x8] sm:$0xf]
  %v25 = vld [vmem:[%s1 + $0xc] sm:$0xf]
  %v26 = vld [vmem:[%s1 + $0x10] sm:$0xf]
  %v27 = vld [vmem:[%s1 + $0x14] sm:$0xf]
  %v28 = vld [vmem:[%s1 + $0x18] sm:$0xf]
  %v29 = vld [vmem:[%s1 + $0x1c] sm:$0xf]
  %v30 = vld [vmem:[%s2] sm:$0x1]
  %v31 = vld [vmem:[%s2 + $0x1] sm:$0x1]
  %v32 = vld [vmem:[#allocation2] sm:$0x3]
  %v33 = vld [vmem:[#allocation2 + $0x2] sm:$0x3]
  %v34 = vld [vmem:[%s0] sm:$0x1]
  %v35 = vld [vmem:[%s0 + $0x1] sm:$0x1]
  %v36 = vunpack.c.l.bf16 %v34
  %v37 = vunpack.c.l.bf16 %v35
  %v38 = vpack.c.bf16 %v32, %v32
  %v39 = vpack.c.bf16 %v33, %v33
  %v44 = vunpack.c.l.b16 %v22
  %v45 = vunpack.c.l.b16 %v23
  %v46 = vunpack.c.l.b16 %v24
  %v47 = vunpack.c.l.b16 %v25
  %v48 = vpack.c.b16 %v45, %v44
  %v49 = vpack.c.b16 %v47, %v46
  %vm52 = vcmask 261120
  %v54 = vsel %vm52, %v38, 0
  %56 = vmatpush.bf16.msra.mxu0 0
  %57 = vmatpush.bf16.msra.mxu0 0
  %58 = vmatpush.bf16.msra.mxu0 0
  %59 = vmatpush.bf16.msra.mxu0 0
  %60 = vmatpush.bf16.msra.mxu0 0
  %61 = vmatpush.bf16.msra.mxu0 0
  %62 = vmatpush.bf16.msra.mxu0 %v49
  %63 = vmatpush.bf16.msra.mxu0 %v48
  %64 = vmatmul.bf16.gmra.mxu0 %v54
  %v65 = vpop.f32.mrf.mxu0
  %v66 = vadd.f32 0.0, %v65
  %v67 = vpop.f32.mrf.mxu0
  %68 = vdwg.mxu0
  %v73 = vunpack.c.l.b16 %v26
  %v74 = vunpack.c.l.b16 %v27
  %v75 = vunpack.c.l.b16 %v28
  %v76 = vunpack.c.l.b16 %v29
  %v77 = vpack.c.b16 %v74, %v73
  %v78 = vpack.c.b16 %v76, %v75
  %v82 = vsel %vm52, %v39, 0
  %84 = vmatpush.bf16.msra.mxu0 0
  %85 = vmatpush.bf16.msra.mxu0 0
  %86 = vmatpush.bf16.msra.mxu0 0
  %87 = vmatpush.bf16.msra.mxu0 0
  %88 = vmatpush.bf16.msra.mxu0 0
  %89 = vmatpush.bf16.msra.mxu0 0
  %90 = vmatpush.bf16.msra.mxu0 %v78
  %91 = vmatpush.bf16.msra.mxu0 %v77
  %92 = vmatmul.bf16.gmra.mxu0 %v82
  %v93 = vpop.f32.mrf.mxu0
  %v94 = vadd.f32 0.0, %v93
  %v95 = vpop.f32.mrf.mxu0
  %96 = vdwg.mxu0
  %v97 = vadd.f32 %v36, %v66
  %v98 = vadd.f32 %v37, %v94
  %v99 = vxor.u32 %v97, 2147483648
  %v100 = vxor.u32 %v98, 2147483648
  %v101 = vmul.f32 %v99, 1.442695
  %v102 = vpow.pop %v101
  %v103 = vmul.f32 %v100, 1.442695
  %v104 = vpow.pop %v103
  %v105 = vadd.f32 %v102, 1.0
  %v106 = vadd.f32 %v104, 1.0
  %v107 = vrcp.pop %v105
  %v108 = vmul.f32 %v105, %v107
  %v109 = vsub.f32 1.0, %v108
  %v110 = vmul.f32 %v107, %v109
  %v111 = vadd.f32 %v107, %v110
  %vm112 = vweird.f32 %v105
  %vm113 = vweird.f32 %v107
  %vm114 = vmor %vm112, %vm113
  %v115 = vsel %vm114, %v107, %v111
  %v116 = vand.u32 2147483647, %v105
  %vm117 = vcmp.eq.f32.partialorder %v116, 8.507059e+37
  %v118 = vand.u32 %v105, 2147483648
  %v119 = vor.u32 1.1754944e-38, %v118
  %v120 = vsel %vm117, %v119, %v115
  %v121 = vmul.f32 1.0, %v120
  %v122 = vrcp.pop %v106
  %v123 = vmul.f32 %v106, %v122
  %v124 = vsub.f32 1.0, %v123
  %v125 = vmul.f32 %v122, %v124
  %v126 = vadd.f32 %v122, %v125
  %vm127 = vweird.f32 %v106
  %vm128 = vweird.f32 %v122
  %vm129 = vmor %vm127, %vm128
  %v130 = vsel %vm129, %v122, %v126
  %v131 = vand.u32 2147483647, %v106
  %vm132 = vcmp.eq.f32.partialorder %v131, 8.507059e+37
  %v133 = vand.u32 %v106, 2147483648
  %v134 = vor.u32 1.1754944e-38, %v133
  %v135 = vsel %vm132, %v134, %v130
  %v136 = vmul.f32 1.0, %v135
  %v139 = vperm.slane %v30, 0
  %v140 = vperm.slane %v31, 0
  %141 = vrot.lane.b32.xlu0 %v139, 64
  %v142 = vpop.permute.xlu0 %141
  %143 = vrot.lane.b32.xlu0 %v140, 64
  %v144 = vpop.permute.xlu0 %143
  %v147 = vadd.f32 %v66, %v142
  %v148 = vadd.f32 %v94, %v144
  %151 = vrot.lane.b32.xlu0 %v147, 64
  %v152 = vpop.permute.xlu0 %151
  %153 = vrot.lane.b32.xlu0 %v148, 64
  %v154 = vpop.permute.xlu0 %153
  %v157 = vmul.f32 %v121, %v152
  %v158 = vmul.f32 %v136, %v154
  %161 = vrot.lane.b32.xlu0 %v157, 64
  %v162 = vpop.permute.xlu0 %161
  %163 = vrot.lane.b32.xlu0 %v158, 64
  %v164 = vpop.permute.xlu0 %163
  %v167 = vadd.f32 %v36, %v162
  %v168 = vadd.f32 %v37, %v164
  %v169 = vtanh.pop %v167
  %v170 = vtanh.pop %v168
  %v171 = vsub.f32 1.0, %v121
  %v172 = vsub.f32 1.0, %v136
  %175 = vrot.lane.b32.xlu0 %v169, 96
  %v176 = vpop.permute.xlu0 %175
  %177 = vrot.lane.b32.xlu0 %v170, 96
  %v178 = vpop.permute.xlu0 %177
  %v181 = vmul.f32 %v171, %v176
  %v182 = vmul.f32 %v172, %v178
  %185 = vrot.lane.b32.xlu0 %v32, 32
  %v186 = vpop.permute.xlu0 %185
  %187 = vrot.lane.b32.xlu0 %v33, 32
  %v188 = vpop.permute.xlu0 %187
  %v191 = vmul.f32 %v121, %v186
  %v192 = vmul.f32 %v136, %v188
  %v193 = vadd.f32 %v181, %v191
  %v194 = vadd.f32 %v182, %v192
  %197 = vst [vmem:[#allocation1] ss:$4 sm:$0xff] %v193
  %v198 = vld.sshfl [vmem:[#allocation1] sm:$0xff pattern:$0x73625140]
  %s199 = scalar_lea.vmem [#allocation1], 32
  %200 = vst [vmem:[%s199] ss:$4 sm:$0xff] %v194
  %v201 = vld.sshfl [vmem:[#allocation1 + $0x20] sm:$0xff pattern:$0x73625140]
  %202 = vrot.lane.b32.xlu0 %v198, 96
  %v203 = vpop.permute.xlu0 %202
  %204 = vrot.lane.b32.xlu0 %v201, 96
  %v205 = vpop.permute.xlu0 %204
  %vm208 = vcmask 254976
  %209 = vst.msk [vmem:[%s3] sm:$0x3] %vm208, %v203
  %210 = vst.msk [vmem:[%s3 + $0x2] sm:$0x3] %vm208, %v205
  %s211 = scalar_lea.vmem %s0, 2
  %v212 = vld [vmem:[%s211] sm:$0x1]
  %v213 = vld [vmem:[%s211 + $0x1] sm:$0x1]
  %v214 = vunpack.c.l.bf16 %v212
  %v215 = vunpack.c.l.bf16 %v213
  %v216 = vpack.c.bf16 %v193, %v193
  %v217 = vpack.c.bf16 %v194, %v194
  %v219 = vunpack.c.l.b16 %v216
  %v220 = vpack.c.b16 %v219, %v219
  %221 = vrot.lane.b32.xlu0 %v220, 96
  %v222 = vpop.permute.xlu0 %221
  %v224 = vsel %vm52, %v222, 0
  %226 = vmatpush.bf16.msra.mxu0 0
  %227 = vmatpush.bf16.msra.mxu0 0
  %228 = vmatpush.bf16.msra.mxu0 0
  %229 = vmatpush.bf16.msra.mxu0 0
  %230 = vmatpush.bf16.msra.mxu0 0
  %231 = vmatpush.bf16.msra.mxu0 0
  %232 = vmatpush.bf16.msra.mxu0 %v49
  %233 = vmatpush.bf16.msra.mxu0 %v48
  %234 = vmatmul.bf16.gmra.mxu0 %v224
  %v235 = vpop.f32.mrf.mxu0
  %v236 = vadd.f32 0.0, %v235
  %v237 = vpop.f32.mrf.mxu0
  %238 = vdwg.mxu0
  %v240 = vunpack.c.l.b16 %v217
  %v241 = vpack.c.b16 %v240, %v240
  %242 = vrot.lane.b32.xlu0 %v241, 96
  %v243 = vpop.permute.xlu0 %242
  %v245 = vsel %vm52, %v243, 0
  %247 = vmatpush.bf16.msra.mxu0 0
  %248 = vmatpush.bf16.msra.mxu0 0
  %249 = vmatpush.bf16.msra.mxu0 0
  %250 = vmatpush.bf16.msra.mxu0 0
  %251 = vmatpush.bf16.msra.mxu0 0
  %252 = vmatpush.bf16.msra.mxu0 0
  %253 = vmatpush.bf16.msra.mxu0 %v78
  %254 = vmatpush.bf16.msra.mxu0 %v77
  %255 = vmatmul.bf16.gmra.mxu0 %v245
  %v256 = vpop.f32.mrf.mxu0
  %v257 = vadd.f32 0.0, %v256
  %v258 = vpop.f32.mrf.mxu0
  %259 = vdwg.mxu0
  %v260 = vadd.f32 %v214, %v236
  %v261 = vadd.f32 %v215, %v257
  %v262 = vxor.u32 %v260, 2147483648
  %v263 = vxor.u32 %v261, 2147483648
  %v264 = vmul.f32 %v262, 1.442695
  %v265 = vpow.pop %v264
  %v266 = vmul.f32 %v263, 1.442695
  %v267 = vpow.pop %v266
  %v268 = vadd.f32 %v265, 1.0
  %v269 = vadd.f32 %v267, 1.0
  %v270 = vrcp.pop %v268
  %v271 = vmul.f32 %v268, %v270
  %v272 = vsub.f32 1.0, %v271
  %v273 = vmul.f32 %v270, %v272
  %v274 = vadd.f32 %v270, %v273
  %vm275 = vweird.f32 %v268
  %vm276 = vweird.f32 %v270
  %vm277 = vmor %vm275, %vm276
  %v278 = vsel %vm277, %v270, %v274
  %v279 = vand.u32 2147483647, %v268
  %vm280 = vcmp.eq.f32.partialorder %v279, 8.507059e+37
  %v281 = vand.u32 %v268, 2147483648
  %v282 = vor.u32 1.1754944e-38, %v281
  %v283 = vsel %vm280, %v282, %v278
  %v284 = vmul.f32 1.0, %v283
  %v285 = vrcp.pop %v269
  %v286 = vmul.f32 %v269, %v285
  %v287 = vsub.f32 1.0, %v286
  %v288 = vmul.f32 %v285, %v287
  %v289 = vadd.f32 %v285, %v288
  %vm290 = vweird.f32 %v269
  %vm291 = vweird.f32 %v285
  %vm292 = vmor %vm290, %vm291
  %v293 = vsel %vm292, %v285, %v289
  %v294 = vand.u32 2147483647, %v269
  %vm295 = vcmp.eq.f32.partialorder %v294, 8.507059e+37
  %v296 = vand.u32 %v269, 2147483648
  %v297 = vor.u32 1.1754944e-38, %v296
  %v298 = vsel %vm295, %v297, %v293
  %v299 = vmul.f32 1.0, %v298
  %v300 = vadd.f32 %v236, %v142
  %v301 = vadd.f32 %v257, %v144
  %304 = vrot.lane.b32.xlu0 %v300, 64
  %v305 = vpop.permute.xlu0 %304
  %306 = vrot.lane.b32.xlu0 %v301, 64
  %v307 = vpop.permute.xlu0 %306
  %v310 = vmul.f32 %v284, %v305
  %v311 = vmul.f32 %v299, %v307
  %314 = vrot.lane.b32.xlu0 %v310, 64
  %v315 = vpop.permute.xlu0 %314
  %316 = vrot.lane.b32.xlu0 %v311, 64
  %v317 = vpop.permute.xlu0 %316
  %v320 = vadd.f32 %v214, %v315
  %v321 = vadd.f32 %v215, %v317
  %v322 = vtanh.pop %v320
  %v323 = vtanh.pop %v321
  %v324 = vsub.f32 1.0, %v284
  %v325 = vsub.f32 1.0, %v299
  %328 = vrot.lane.b32.xlu0 %v322, 96
  %v329 = vpop.permute.xlu0 %328
  %330 = vrot.lane.b32.xlu0 %v323, 96
  %v331 = vpop.permute.xlu0 %330
  %v334 = vmul.f32 %v324, %v329
  %v335 = vmul.f32 %v325, %v331
  %v336 = vmul.f32 %v284, %v193
  %v337 = vmul.f32 %v299, %v194
  %v338 = vadd.f32 %v334, %v336
  %v339 = vadd.f32 %v335, %v337
  %342 = vst [vmem:[#allocation1] ss:$4 sm:$0xff] %v338
  %v343 = vld.sshfl [vmem:[#allocation1] sm:$0xff pattern:$0x73625140]
  %s344 = scalar_lea.vmem [#allocation1], 32
  %345 = vst [vmem:[%s344] ss:$4 sm:$0xff] %v339
  %v346 = vld.sshfl [vmem:[#allocation1 + $0x20] sm:$0xff pattern:$0x73625140]
  %347 = vrot.lane.b32.xlu0 %v343, 96
  %v348 = vpop.permute.xlu0 %347
  %349 = vrot.lane.b32.xlu0 %v346, 96
  %v350 = vpop.permute.xlu0 %349
  %s353 = scalar_lea.vmem %s3, 4
  %354 = vst.msk [vmem:[%s353] sm:$0x3] %vm208, %v348
  %355 = vst.msk [vmem:[%s353 + $0x2] sm:$0x3] %vm208, %v350
  %s356 = scalar_lea.vmem %s0, 4
  %v357 = vld [vmem:[%s356] sm:$0x1]
  %v358 = vld [vmem:[%s356 + $0x1] sm:$0x1]
  %v359 = vunpack.c.l.bf16 %v357
  %v360 = vunpack.c.l.bf16 %v358
  %v361 = vpack.c.bf16 %v338, %v338
  %v362 = vpack.c.bf16 %v339, %v339
  %v364 = vunpack.c.l.b16 %v361
  %v365 = vpack.c.b16 %v364, %v364
  %366 = vrot.lane.b32.xlu0 %v365, 96
  %v367 = vpop.permute.xlu0 %366
  %v369 = vsel %vm52, %v367, 0
  %371 = vmatpush.bf16.msra.mxu0 0
  %372 = vmatpush.bf16.msra.mxu0 0
  %373 = vmatpush.bf16.msra.mxu0 0
  %374 = vmatpush.bf16.msra.mxu0 0
  %375 = vmatpush.bf16.msra.mxu0 0
  %376 = vmatpush.bf16.msra.mxu0 0
  %377 = vmatpush.bf16.msra.mxu0 %v49
  %378 = vmatpush.bf16.msra.mxu0 %v48
  %379 = vmatmul.bf16.gmra.mxu0 %v369
  %v380 = vpop.f32.mrf.mxu0
  %v381 = vadd.f32 0.0, %v380
  %v382 = vpop.f32.mrf.mxu0
  %383 = vdwg.mxu0
  %v385 = vunpack.c.l.b16 %v362
  %v386 = vpack.c.b16 %v385, %v385
  %387 = vrot.lane.b32.xlu0 %v386, 96
  %v388 = vpop.permute.xlu0 %387
  %v390 = vsel %vm52, %v388, 0
  %392 = vmatpush.bf16.msra.mxu0 0
  %393 = vmatpush.bf16.msra.mxu0 0
  %394 = vmatpush.bf16.msra.mxu0 0
  %395 = vmatpush.bf16.msra.mxu0 0
  %396 = vmatpush.bf16.msra.mxu0 0
  %397 = vmatpush.bf16.msra.mxu0 0
  %398 = vmatpush.bf16.msra.mxu0 %v78
  %399 = vmatpush.bf16.msra.mxu0 %v77
  %400 = vmatmul.bf16.gmra.mxu0 %v390
  %v401 = vpop.f32.mrf.mxu0
  %v402 = vadd.f32 0.0, %v401
  %v403 = vpop.f32.mrf.mxu0
  %404 = vdwg.mxu0
  %v405 = vadd.f32 %v359, %v381
  %v406 = vadd.f32 %v360, %v402
  %v407 = vxor.u32 %v405, 2147483648
  %v408 = vxor.u32 %v406, 2147483648
  %v409 = vmul.f32 %v407, 1.442695
  %v410 = vpow.pop %v409
  %v411 = vmul.f32 %v408, 1.442695
  %v412 = vpow.pop %v411
  %v413 = vadd.f32 %v410, 1.0
  %v414 = vadd.f32 %v412, 1.0
  %v415 = vrcp.pop %v413
  %v416 = vmul.f32 %v413, %v415
  %v417 = vsub.f32 1.0, %v416
  %v418 = vmul.f32 %v415, %v417
  %v419 = vadd.f32 %v415, %v418
  %vm420 = vweird.f32 %v413
  %vm421 = vweird.f32 %v415
  %vm422 = vmor %vm420, %vm421
  %v423 = vsel %vm422, %v415, %v419
  %v424 = vand.u32 2147483647, %v413
  %vm425 = vcmp.eq.f32.partialorder %v424, 8.507059e+37
  %v426 = vand.u32 %v413, 2147483648
  %v427 = vor.u32 1.1754944e-38, %v426
  %v428 = vsel %vm425, %v427, %v423
  %v429 = vmul.f32 1.0, %v428
  %v430 = vrcp.pop %v414
  %v431 = vmul.f32 %v414, %v430
  %v432 = vsub.f32 1.0, %v431
  %v433 = vmul.f32 %v430, %v432
  %v434 = vadd.f32 %v430, %v433
  %vm435 = vweird.f32 %v414
  %vm436 = vweird.f32 %v430
  %vm437 = vmor %vm435, %vm436
  %v438 = vsel %vm437, %v430, %v434
  %v439 = vand.u32 2147483647, %v414
  %vm440 = vcmp.eq.f32.partialorder %v439, 8.507059e+37
  %v441 = vand.u32 %v414, 2147483648
  %v442 = vor.u32 1.1754944e-38, %v441
  %v443 = vsel %vm440, %v442, %v438
  %v444 = vmul.f32 1.0, %v443
  %v445 = vadd.f32 %v381, %v142
  %v446 = vadd.f32 %v402, %v144
  %449 = vrot.lane.b32.xlu0 %v445, 64
  %v450 = vpop.permute.xlu0 %449
  %451 = vrot.lane.b32.xlu0 %v446, 64
  %v452 = vpop.permute.xlu0 %451
  %v455 = vmul.f32 %v429, %v450
  %v456 = vmul.f32 %v444, %v452
  %459 = vrot.lane.b32.xlu0 %v455, 64
  %v460 = vpop.permute.xlu0 %459
  %461 = vrot.lane.b32.xlu0 %v456, 64
  %v462 = vpop.permute.xlu0 %461
  %v465 = vadd.f32 %v359, %v460
  %v466 = vadd.f32 %v360, %v462
  %v467 = vtanh.pop %v465
  %v468 = vtanh.pop %v466
  %v469 = vsub.f32 1.0, %v429
  %v470 = vsub.f32 1.0, %v444
  %473 = vrot.lane.b32.xlu0 %v467, 96
  %v474 = vpop.permute.xlu0 %473
  %475 = vrot.lane.b32.xlu0 %v468, 96
  %v476 = vpop.permute.xlu0 %475
  %v479 = vmul.f32 %v469, %v474
  %v480 = vmul.f32 %v470, %v476
  %v481 = vmul.f32 %v429, %v338
  %v482 = vmul.f32 %v444, %v339
  %v483 = vadd.f32 %v479, %v481
  %v484 = vadd.f32 %v480, %v482
  %487 = vst [vmem:[#allocation1] ss:$4 sm:$0xff] %v483
  %v488 = vld.sshfl [vmem:[#allocation1] sm:$0xff pattern:$0x73625140]
  %s489 = scalar_lea.vmem [#allocation1], 32
  %490 = vst [vmem:[%s489] ss:$4 sm:$0xff] %v484
  %v491 = vld.sshfl [vmem:[#allocation1 + $0x20] sm:$0xff pattern:$0x73625140]
  %492 = vrot.lane.b32.xlu0 %v488, 96
  %v493 = vpop.permute.xlu0 %492
  %494 = vrot.lane.b32.xlu0 %v491, 96
  %v495 = vpop.permute.xlu0 %494
  %s498 = scalar_lea.vmem %s3, 8
  %499 = vst.msk [vmem:[%s498] sm:$0x3] %vm208, %v493
  %500 = vst.msk [vmem:[%s498 + $0x2] sm:$0x3] %vm208, %v495
  %s501 = scalar_lea.vmem %s0, 6
  %v502 = vld [vmem:[%s501] sm:$0x1]
  %v503 = vld [vmem:[%s501 + $0x1] sm:$0x1]
  %v504 = vunpack.c.l.bf16 %v502
  %v505 = vunpack.c.l.bf16 %v503
  %v506 = vpack.c.bf16 %v483, %v483
  %v507 = vpack.c.bf16 %v484, %v484
  %v509 = vunpack.c.l.b16 %v506
  %v510 = vpack.c.b16 %v509, %v509
  %511 = vrot.lane.b32.xlu0 %v510, 96
  %v512 = vpop.permute.xlu0 %511
  %v514 = vsel %vm52, %v512, 0
  %516 = vmatpush.bf16.msra.mxu0 0
  %517 = vmatpush.bf16.msra.mxu0 0
  %518 = vmatpush.bf16.msra.mxu0 0
  %519 = vmatpush.bf16.msra.mxu0 0
  %520 = vmatpush.bf16.msra.mxu0 0
  %521 = vmatpush.bf16.msra.mxu0 0
  %522 = vmatpush.bf16.msra.mxu0 %v49
  %523 = vmatpush.bf16.msra.mxu0 %v48
  %524 = vmatmul.bf16.gmra.mxu0 %v514
  %v525 = vpop.f32.mrf.mxu0
  %v526 = vadd.f32 0.0, %v525
  %v527 = vpop.f32.mrf.mxu0
  %528 = vdwg.mxu0
  %v530 = vunpack.c.l.b16 %v507
  %v531 = vpack.c.b16 %v530, %v530
  %532 = vrot.lane.b32.xlu0 %v531, 96
  %v533 = vpop.permute.xlu0 %532
  %v535 = vsel %vm52, %v533, 0
  %537 = vmatpush.bf16.msra.mxu0 0
  %538 = vmatpush.bf16.msra.mxu0 0
  %539 = vmatpush.bf16.msra.mxu0 0
  %540 = vmatpush.bf16.msra.mxu0 0
  %541 = vmatpush.bf16.msra.mxu0 0
  %542 = vmatpush.bf16.msra.mxu0 0
  %543 = vmatpush.bf16.msra.mxu0 %v78
  %544 = vmatpush.bf16.msra.mxu0 %v77
  %545 = vmatmul.bf16.gmra.mxu0 %v535
  %v546 = vpop.f32.mrf.mxu0
  %v547 = vadd.f32 0.0, %v546
  %v548 = vpop.f32.mrf.mxu0
  %549 = vdwg.mxu0
  %v550 = vadd.f32 %v504, %v526
  %v551 = vadd.f32 %v505, %v547
  %v552 = vxor.u32 %v550, 2147483648
  %v553 = vxor.u32 %v551, 2147483648
  %v554 = vmul.f32 %v552, 1.442695
  %v555 = vpow.pop %v554
  %v556 = vmul.f32 %v553, 1.442695
  %v557 = vpow.pop %v556
  %v558 = vadd.f32 %v555, 1.0
  %v559 = vadd.f32 %v557, 1.0
  %v560 = vrcp.pop %v558
  %v561 = vmul.f32 %v558, %v560
  %v562 = vsub.f32 1.0, %v561
  %v563 = vmul.f32 %v560, %v562
  %v564 = vadd.f32 %v560, %v563
  %vm565 = vweird.f32 %v558
  %vm566 = vweird.f32 %v560
  %vm567 = vmor %vm565, %vm566
  %v568 = vsel %vm567, %v560, %v564
  %v569 = vand.u32 2147483647, %v558
  %vm570 = vcmp.eq.f32.partialorder %v569, 8.507059e+37
  %v571 = vand.u32 %v558, 2147483648
  %v572 = vor.u32 1.1754944e-38, %v571
  %v573 = vsel %vm570, %v572, %v568
  %v574 = vmul.f32 1.0, %v573
  %v575 = vrcp.pop %v559
  %v576 = vmul.f32 %v559, %v575
  %v577 = vsub.f32 1.0, %v576
  %v578 = vmul.f32 %v575, %v577
  %v579 = vadd.f32 %v575, %v578
  %vm580 = vweird.f32 %v559
  %vm581 = vweird.f32 %v575
  %vm582 = vmor %vm580, %vm581
  %v583 = vsel %vm582, %v575, %v579
  %v584 = vand.u32 2147483647, %v559
  %vm585 = vcmp.eq.f32.partialorder %v584, 8.507059e+37
  %v586 = vand.u32 %v559, 2147483648
  %v587 = vor.u32 1.1754944e-38, %v586
  %v588 = vsel %vm585, %v587, %v583
  %v589 = vmul.f32 1.0, %v588
  %v590 = vadd.f32 %v526, %v142
  %v591 = vadd.f32 %v547, %v144
  %594 = vrot.lane.b32.xlu0 %v590, 64
  %v595 = vpop.permute.xlu0 %594
  %596 = vrot.lane.b32.xlu0 %v591, 64
  %v597 = vpop.permute.xlu0 %596
  %v600 = vmul.f32 %v574, %v595
  %v601 = vmul.f32 %v589, %v597
  %604 = vrot.lane.b32.xlu0 %v600, 64
  %v605 = vpop.permute.xlu0 %604
  %606 = vrot.lane.b32.xlu0 %v601, 64
  %v607 = vpop.permute.xlu0 %606
  %v610 = vadd.f32 %v504, %v605
  %v611 = vadd.f32 %v505, %v607
  %v612 = vtanh.pop %v610
  %v613 = vtanh.pop %v611
  %v614 = vsub.f32 1.0, %v574
  %v615 = vsub.f32 1.0, %v589
  %618 = vrot.lane.b32.xlu0 %v612, 96
  %v619 = vpop.permute.xlu0 %618
  %620 = vrot.lane.b32.xlu0 %v613, 96
  %v621 = vpop.permute.xlu0 %620
  %v624 = vmul.f32 %v614, %v619
  %v625 = vmul.f32 %v615, %v621
  %v626 = vmul.f32 %v574, %v483
  %v627 = vmul.f32 %v589, %v484
  %v628 = vadd.f32 %v624, %v626
  %v629 = vadd.f32 %v625, %v627
  %632 = vst [vmem:[#allocation1] ss:$4 sm:$0xff] %v628
  %v633 = vld.sshfl [vmem:[#allocation1] sm:$0xff pattern:$0x73625140]
  %s634 = scalar_lea.vmem [#allocation1], 32
  %635 = vst [vmem:[%s634] ss:$4 sm:$0xff] %v629
  %v636 = vld.sshfl [vmem:[#allocation1 + $0x20] sm:$0xff pattern:$0x73625140]
  %637 = vrot.lane.b32.xlu0 %v633, 96
  %v638 = vpop.permute.xlu0 %637
  %639 = vrot.lane.b32.xlu0 %v636, 96
  %v640 = vpop.permute.xlu0 %639
  %s643 = scalar_lea.vmem %s3, 12
  %644 = vst.msk [vmem:[%s643] sm:$0x3] %vm208, %v638
  %645 = vst.msk [vmem:[%s643 + $0x2] sm:$0x3] %vm208, %v640
  %s646 = scalar_lea.vmem %s0, 8
  %v647 = vld [vmem:[%s646] sm:$0x1]
  %v648 = vld [vmem:[%s646 + $0x1] sm:$0x1]
  %v649 = vunpack.c.l.bf16 %v647
  %v650 = vunpack.c.l.bf16 %v648
  %v651 = vpack.c.bf16 %v628, %v628
  %v652 = vpack.c.bf16 %v629, %v629
  %v654 = vunpack.c.l.b16 %v651
  %v655 = vpack.c.b16 %v654, %v654
  %656 = vrot.lane.b32.xlu0 %v655, 96
  %v657 = vpop.permute.xlu0 %656
  %v659 = vsel %vm52, %v657, 0
  %661 = vmatpush.bf16.msra.mxu0 0
  %662 = vmatpush.bf16.msra.mxu0 0
  %663 = vmatpush.bf16.msra.mxu0 0
  %664 = vmatpush.bf16.msra.mxu0 0
  %665 = vmatpush.bf16.msra.mxu0 0
  %666 = vmatpush.bf16.msra.mxu0 0
  %667 = vmatpush.bf16.msra.mxu0 %v49
  %668 = vmatpush.bf16.msra.mxu0 %v48
  %669 = vmatmul.bf16.gmra.mxu0 %v659
  %v670 = vpop.f32.mrf.mxu0
  %v671 = vadd.f32 0.0, %v670
  %v672 = vpop.f32.mrf.mxu0
  %673 = vdwg.mxu0
  %v675 = vunpack.c.l.b16 %v652
  %v676 = vpack.c.b16 %v675, %v675
  %677 = vrot.lane.b32.xlu0 %v676, 96
  %v678 = vpop.permute.xlu0 %677
  %v680 = vsel %vm52, %v678, 0
  %682 = vmatpush.bf16.msra.mxu0 0
  %683 = vmatpush.bf16.msra.mxu0 0
  %684 = vmatpush.bf16.msra.mxu0 0
  %685 = vmatpush.bf16.msra.mxu0 0
  %686 = vmatpush.bf16.msra.mxu0 0
  %687 = vmatpush.bf16.msra.mxu0 0
  %688 = vmatpush.bf16.msra.mxu0 %v78
  %689 = vmatpush.bf16.msra.mxu0 %v77
  %690 = vmatmul.bf16.gmra.mxu0 %v680
  %v691 = vpop.f32.mrf.mxu0
  %v692 = vadd.f32 0.0, %v691
  %v693 = vpop.f32.mrf.mxu0
  %694 = vdwg.mxu0
  %v695 = vadd.f32 %v649, %v671
  %v696 = vadd.f32 %v650, %v692
  %v697 = vxor.u32 %v695, 2147483648
  %v698 = vxor.u32 %v696, 2147483648
  %v699 = vmul.f32 %v697, 1.442695
  %v700 = vpow.pop %v699
  %v701 = vmul.f32 %v698, 1.442695
  %v702 = vpow.pop %v701
  %v703 = vadd.f32 %v700, 1.0
  %v704 = vadd.f32 %v702, 1.0
  %v705 = vrcp.pop %v703
  %v706 = vmul.f32 %v703, %v705
  %v707 = vsub.f32 1.0, %v706
  %v708 = vmul.f32 %v705, %v707
  %v709 = vadd.f32 %v705, %v708
  %vm710 = vweird.f32 %v703
  %vm711 = vweird.f32 %v705
  %vm712 = vmor %vm710, %vm711
  %v713 = vsel %vm712, %v705, %v709
  %v714 = vand.u32 2147483647, %v703
  %vm715 = vcmp.eq.f32.partialorder %v714, 8.507059e+37
  %v716 = vand.u32 %v703, 2147483648
  %v717 = vor.u32 1.1754944e-38, %v716
  %v718 = vsel %vm715, %v717, %v713
  %v719 = vmul.f32 1.0, %v718
  %v720 = vrcp.pop %v704
  %v721 = vmul.f32 %v704, %v720
  %v722 = vsub.f32 1.0, %v721
  %v723 = vmul.f32 %v720, %v722
  %v724 = vadd.f32 %v720, %v723
  %vm725 = vweird.f32 %v704
  %vm726 = vweird.f32 %v720
  %vm727 = vmor %vm725, %vm726
  %v728 = vsel %vm727, %v720, %v724
  %v729 = vand.u32 2147483647, %v704
  %vm730 = vcmp.eq.f32.partialorder %v729, 8.507059e+37
  %v731 = vand.u32 %v704, 2147483648
  %v732 = vor.u32 1.1754944e-38, %v731
  %v733 = vsel %vm730, %v732, %v728
  %v734 = vmul.f32 1.0, %v733
  %v735 = vadd.f32 %v671, %v142
  %v736 = vadd.f32 %v692, %v144
  %739 = vrot.lane.b32.xlu0 %v735, 64
  %v740 = vpop.permute.xlu0 %739
  %741 = vrot.lane.b32.xlu0 %v736, 64
  %v742 = vpop.permute.xlu0 %741
  %v745 = vmul.f32 %v719, %v740
  %v746 = vmul.f32 %v734, %v742
  %749 = vrot.lane.b32.xlu0 %v745, 64
  %v750 = vpop.permute.xlu0 %749
  %751 = vrot.lane.b32.xlu0 %v746, 64
  %v752 = vpop.permute.xlu0 %751
  %v755 = vadd.f32 %v649, %v750
  %v756 = vadd.f32 %v650, %v752
  %v757 = vtanh.pop %v755
  %v758 = vtanh.pop %v756
  %v759 = vsub.f32 1.0, %v719
  %v760 = vsub.f32 1.0, %v734
  %763 = vrot.lane.b32.xlu0 %v757, 96
  %v764 = vpop.permute.xlu0 %763
  %765 = vrot.lane.b32.xlu0 %v758, 96
  %v766 = vpop.permute.xlu0 %765
  %v769 = vmul.f32 %v759, %v764
  %v770 = vmul.f32 %v760, %v766
  %v771 = vmul.f32 %v719, %v628
  %v772 = vmul.f32 %v734, %v629
  %v773 = vadd.f32 %v769, %v771
  %v774 = vadd.f32 %v770, %v772
  %777 = vst [vmem:[#allocation1] ss:$4 sm:$0xff] %v773
  %v778 = vld.sshfl [vmem:[#allocation1] sm:$0xff pattern:$0x73625140]
  %s779 = scalar_lea.vmem [#allocation1], 32
  %780 = vst [vmem:[%s779] ss:$4 sm:$0xff] %v774
  %v781 = vld.sshfl [vmem:[#allocation1 + $0x20] sm:$0xff pattern:$0x73625140]
  %782 = vrot.lane.b32.xlu0 %v778, 96
  %v783 = vpop.permute.xlu0 %782
  %784 = vrot.lane.b32.xlu0 %v781, 96
  %v785 = vpop.permute.xlu0 %784
  %s788 = scalar_lea.vmem %s3, 16
  %789 = vst.msk [vmem:[%s788] sm:$0x3] %vm208, %v783
  %790 = vst.msk [vmem:[%s788 + $0x2] sm:$0x3] %vm208, %v785
  %s791 = scalar_lea.vmem %s0, 10
  %v792 = vld [vmem:[%s791] sm:$0x1]
  %v793 = vld [vmem:[%s791 + $0x1] sm:$0x1]
  %v794 = vunpack.c.l.bf16 %v792
  %v795 = vunpack.c.l.bf16 %v793
  %v796 = vpack.c.bf16 %v773, %v773
  %v797 = vpack.c.bf16 %v774, %v774
  %v799 = vunpack.c.l.b16 %v796
  %v800 = vpack.c.b16 %v799, %v799
  %801 = vrot.lane.b32.xlu0 %v800, 96
  %v802 = vpop.permute.xlu0 %801
  %v804 = vsel %vm52, %v802, 0
  %806 = vmatpush.bf16.msra.mxu0 0
  %807 = vmatpush.bf16.msra.mxu0 0
  %808 = vmatpush.bf16.msra.mxu0 0
  %809 = vmatpush.bf16.msra.mxu0 0
  %810 = vmatpush.bf16.msra.mxu0 0
  %811 = vmatpush.bf16.msra.mxu0 0
  %812 = vmatpush.bf16.msra.mxu0 %v49
  %813 = vmatpush.bf16.msra.mxu0 %v48
  %814 = vmatmul.bf16.gmra.mxu0 %v804
  %v815 = vpop.f32.mrf.mxu0
  %v816 = vadd.f32 0.0, %v815
  %v817 = vpop.f32.mrf.mxu0
  %818 = vdwg.mxu0
  %v820 = vunpack.c.l.b16 %v797
  %v821 = vpack.c.b16 %v820, %v820
  %822 = vrot.lane.b32.xlu0 %v821, 96
  %v823 = vpop.permute.xlu0 %822
  %v825 = vsel %vm52, %v823, 0
  %827 = vmatpush.bf16.msra.mxu0 0
  %828 = vmatpush.bf16.msra.mxu0 0
  %829 = vmatpush.bf16.msra.mxu0 0
  %830 = vmatpush.bf16.msra.mxu0 0
  %831 = vmatpush.bf16.msra.mxu0 0
  %832 = vmatpush.bf16.msra.mxu0 0
  %833 = vmatpush.bf16.msra.mxu0 %v78
  %834 = vmatpush.bf16.msra.mxu0 %v77
  %835 = vmatmul.bf16.gmra.mxu0 %v825
  %v836 = vpop.f32.mrf.mxu0
  %v837 = vadd.f32 0.0, %v836
  %v838 = vpop.f32.mrf.mxu0
  %839 = vdwg.mxu0
  %v840 = vadd.f32 %v794, %v816
  %v841 = vadd.f32 %v795, %v837
  %v842 = vxor.u32 %v840, 2147483648
  %v843 = vxor.u32 %v841, 2147483648
  %v844 = vmul.f32 %v842, 1.442695
  %v845 = vpow.pop %v844
  %v846 = vmul.f32 %v843, 1.442695
  %v847 = vpow.pop %v846
  %v848 = vadd.f32 %v845, 1.0
  %v849 = vadd.f32 %v847, 1.0
  %v850 = vrcp.pop %v848
  %v851 = vmul.f32 %v848, %v850
  %v852 = vsub.f32 1.0, %v851
  %v853 = vmul.f32 %v850, %v852
  %v854 = vadd.f32 %v850, %v853
  %vm855 = vweird.f32 %v848
  %vm856 = vweird.f32 %v850
  %vm857 = vmor %vm855, %vm856
  %v858 = vsel %vm857, %v850, %v854
  %v859 = vand.u32 2147483647, %v848
  %vm860 = vcmp.eq.f32.partialorder %v859, 8.507059e+37
  %v861 = vand.u32 %v848, 2147483648
  %v862 = vor.u32 1.1754944e-38, %v861
  %v863 = vsel %vm860, %v862, %v858
  %v864 = vmul.f32 1.0, %v863
  %v865 = vrcp.pop %v849
  %v866 = vmul.f32 %v849, %v865
  %v867 = vsub.f32 1.0, %v866
  %v868 = vmul.f32 %v865, %v867
  %v869 = vadd.f32 %v865, %v868
  %vm870 = vweird.f32 %v849
  %vm871 = vweird.f32 %v865
  %vm872 = vmor %vm870, %vm871
  %v873 = vsel %vm872, %v865, %v869
  %v874 = vand.u32 2147483647, %v849
  %vm875 = vcmp.eq.f32.partialorder %v874, 8.507059e+37
  %v876 = vand.u32 %v849, 2147483648
  %v877 = vor.u32 1.1754944e-38, %v876
  %v878 = vsel %vm875, %v877, %v873
  %v879 = vmul.f32 1.0, %v878
  %v880 = vadd.f32 %v816, %v142
  %v881 = vadd.f32 %v837, %v144
  %884 = vrot.lane.b32.xlu0 %v880, 64
  %v885 = vpop.permute.xlu0 %884
  %886 = vrot.lane.b32.xlu0 %v881, 64
  %v887 = vpop.permute.xlu0 %886
  %v890 = vmul.f32 %v864, %v885
  %v891 = vmul.f32 %v879, %v887
  %894 = vrot.lane.b32.xlu0 %v890, 64
  %v895 = vpop.permute.xlu0 %894
  %896 = vrot.lane.b32.xlu0 %v891, 64
  %v897 = vpop.permute.xlu0 %896
  %v900 = vadd.f32 %v794, %v895
  %v901 = vadd.f32 %v795, %v897
  %v902 = vtanh.pop %v900
  %v903 = vtanh.pop %v901
  %v904 = vsub.f32 1.0, %v864
  %v905 = vsub.f32 1.0, %v879
  %908 = vrot.lane.b32.xlu0 %v902, 96
  %v909 = vpop.permute.xlu0 %908
  %910 = vrot.lane.b32.xlu0 %v903, 96
  %v911 = vpop.permute.xlu0 %910
  %v914 = vmul.f32 %v904, %v909
  %v915 = vmul.f32 %v905, %v911
  %v916 = vmul.f32 %v864, %v773
  %v917 = vmul.f32 %v879, %v774
  %v918 = vadd.f32 %v914, %v916
  %v919 = vadd.f32 %v915, %v917
  %922 = vst [vmem:[#allocation1] ss:$4 sm:$0xff] %v918
  %v923 = vld.sshfl [vmem:[#allocation1] sm:$0xff pattern:$0x73625140]
  %s924 = scalar_lea.vmem [#allocation1], 32
  %925 = vst [vmem:[%s924] ss:$4 sm:$0xff] %v919
  %v926 = vld.sshfl [vmem:[#allocation1 + $0x20] sm:$0xff pattern:$0x73625140]
  %927 = vrot.lane.b32.xlu0 %v923, 96
  %v928 = vpop.permute.xlu0 %927
  %929 = vrot.lane.b32.xlu0 %v926, 96
  %v930 = vpop.permute.xlu0 %929
  %s933 = scalar_lea.vmem %s3, 20
  %934 = vst.msk [vmem:[%s933] sm:$0x3] %vm208, %v928
  %935 = vst.msk [vmem:[%s933 + $0x2] sm:$0x3] %vm208, %v930
  %s936 = scalar_lea.vmem %s0, 12
  %v937 = vld [vmem:[%s936] sm:$0x1]
  %v938 = vld [vmem:[%s936 + $0x1] sm:$0x1]
  %v939 = vunpack.c.l.bf16 %v937
  %v940 = vunpack.c.l.bf16 %v938
  %v941 = vpack.c.bf16 %v918, %v918
  %v942 = vpack.c.bf16 %v919, %v919
  %v944 = vunpack.c.l.b16 %v941
  %v945 = vpack.c.b16 %v944, %v944
  %946 = vrot.lane.b32.xlu0 %v945, 96
  %v947 = vpop.permute.xlu0 %946
  %v949 = vsel %vm52, %v947, 0
  %951 = vmatpush.bf16.msra.mxu0 0
  %952 = vmatpush.bf16.msra.mxu0 0
  %953 = vmatpush.bf16.msra.mxu0 0
  %954 = vmatpush.bf16.msra.mxu0 0
  %955 = vmatpush.bf16.msra.mxu0 0
  %956 = vmatpush.bf16.msra.mxu0 0
  %957 = vmatpush.bf16.msra.mxu0 %v49
  %958 = vmatpush.bf16.msra.mxu0 %v48
  %959 = vmatmul.bf16.gmra.mxu0 %v949
  %v960 = vpop.f32.mrf.mxu0
  %v961 = vadd.f32 0.0, %v960
  %v962 = vpop.f32.mrf.mxu0
  %963 = vdwg.mxu0
  %v965 = vunpack.c.l.b16 %v942
  %v966 = vpack.c.b16 %v965, %v965
  %967 = vrot.lane.b32.xlu0 %v966, 96
  %v968 = vpop.permute.xlu0 %967
  %v970 = vsel %vm52, %v968, 0
  %972 = vmatpush.bf16.msra.mxu0 0
  %973 = vmatpush.bf16.msra.mxu0 0
  %974 = vmatpush.bf16.msra.mxu0 0
  %975 = vmatpush.bf16.msra.mxu0 0
  %976 = vmatpush.bf16.msra.mxu0 0
  %977 = vmatpush.bf16.msra.mxu0 0
  %978 = vmatpush.bf16.msra.mxu0 %v78
  %979 = vmatpush.bf16.msra.mxu0 %v77
  %980 = vmatmul.bf16.gmra.mxu0 %v970
  %v981 = vpop.f32.mrf.mxu0
  %v982 = vadd.f32 0.0, %v981
  %v983 = vpop.f32.mrf.mxu0
  %984 = vdwg.mxu0
  %v985 = vadd.f32 %v939, %v961
  %v986 = vadd.f32 %v940, %v982
  %v987 = vxor.u32 %v985, 2147483648
  %v988 = vxor.u32 %v986, 2147483648
  %v989 = vmul.f32 %v987, 1.442695
  %v990 = vpow.pop %v989
  %v991 = vmul.f32 %v988, 1.442695
  %v992 = vpow.pop %v991
  %v993 = vadd.f32 %v990, 1.0
  %v994 = vadd.f32 %v992, 1.0
  %v995 = vrcp.pop %v993
  %v996 = vmul.f32 %v993, %v995
  %v997 = vsub.f32 1.0, %v996
  %v998 = vmul.f32 %v995, %v997
  %v999 = vadd.f32 %v995, %v998
  %vm1000 = vweird.f32 %v993
  %vm1001 = vweird.f32 %v995
  %vm1002 = vmor %vm1000, %vm1001
  %v1003 = vsel %vm1002, %v995, %v999
  %v1004 = vand.u32 2147483647, %v993
  %vm1005 = vcmp.eq.f32.partialorder %v1004, 8.507059e+37
  %v1006 = vand.u32 %v993, 2147483648
  %v1007 = vor.u32 1.1754944e-38, %v1006
  %v1008 = vsel %vm1005, %v1007, %v1003
  %v1009 = vmul.f32 1.0, %v1008
  %v1010 = vrcp.pop %v994
  %v1011 = vmul.f32 %v994, %v1010
  %v1012 = vsub.f32 1.0, %v1011
  %v1013 = vmul.f32 %v1010, %v1012
  %v1014 = vadd.f32 %v1010, %v1013
  %vm1015 = vweird.f32 %v994
  %vm1016 = vweird.f32 %v1010
  %vm1017 = vmor %vm1015, %vm1016
  %v1018 = vsel %vm1017, %v1010, %v1014
  %v1019 = vand.u32 2147483647, %v994
  %vm1020 = vcmp.eq.f32.partialorder %v1019, 8.507059e+37
  %v1021 = vand.u32 %v994, 2147483648
  %v1022 = vor.u32 1.1754944e-38, %v1021
  %v1023 = vsel %vm1020, %v1022, %v1018
  %v1024 = vmul.f32 1.0, %v1023
  %v1025 = vadd.f32 %v961, %v142
  %v1026 = vadd.f32 %v982, %v144
  %1029 = vrot.lane.b32.xlu0 %v1025, 64
  %v1030 = vpop.permute.xlu0 %1029
  %1031 = vrot.lane.b32.xlu0 %v1026, 64
  %v1032 = vpop.permute.xlu0 %1031
  %v1035 = vmul.f32 %v1009, %v1030
  %v1036 = vmul.f32 %v1024, %v1032
  %1039 = vrot.lane.b32.xlu0 %v1035, 64
  %v1040 = vpop.permute.xlu0 %1039
  %1041 = vrot.lane.b32.xlu0 %v1036, 64
  %v1042 = vpop.permute.xlu0 %1041
  %v1045 = vadd.f32 %v939, %v1040
  %v1046 = vadd.f32 %v940, %v1042
  %v1047 = vtanh.pop %v1045
  %v1048 = vtanh.pop %v1046
  %v1049 = vsub.f32 1.0, %v1009
  %v1050 = vsub.f32 1.0, %v1024
  %1053 = vrot.lane.b32.xlu0 %v1047, 96
  %v1054 = vpop.permute.xlu0 %1053
  %1055 = vrot.lane.b32.xlu0 %v1048, 96
  %v1056 = vpop.permute.xlu0 %1055
  %v1059 = vmul.f32 %v1049, %v1054
  %v1060 = vmul.f32 %v1050, %v1056
  %v1061 = vmul.f32 %v1009, %v918
  %v1062 = vmul.f32 %v1024, %v919
  %v1063 = vadd.f32 %v1059, %v1061
  %v1064 = vadd.f32 %v1060, %v1062
  %1067 = vst [vmem:[#allocation1] ss:$4 sm:$0xff] %v1063
  %v1068 = vld.sshfl [vmem:[#allocation1] sm:$0xff pattern:$0x73625140]
  %s1069 = scalar_lea.vmem [#allocation1], 32
  %1070 = vst [vmem:[%s1069] ss:$4 sm:$0xff] %v1064
  %v1071 = vld.sshfl [vmem:[#allocation1 + $0x20] sm:$0xff pattern:$0x73625140]
  %1072 = vrot.lane.b32.xlu0 %v1068, 96
  %v1073 = vpop.permute.xlu0 %1072
  %1074 = vrot.lane.b32.xlu0 %v1071, 96
  %v1075 = vpop.permute.xlu0 %1074
  %s1078 = scalar_lea.vmem %s3, 24
  %1079 = vst.msk [vmem:[%s1078] sm:$0x3] %vm208, %v1073
  %1080 = vst.msk [vmem:[%s1078 + $0x2] sm:$0x3] %vm208, %v1075
  %s1081 = scalar_lea.vmem %s0, 14
  %v1082 = vld [vmem:[%s1081] sm:$0x1]
  %v1083 = vld [vmem:[%s1081 + $0x1] sm:$0x1]
  %v1084 = vunpack.c.l.bf16 %v1082
  %v1085 = vunpack.c.l.bf16 %v1083
  %v1086 = vpack.c.bf16 %v1063, %v1063
  %v1087 = vpack.c.bf16 %v1064, %v1064
  %v1089 = vunpack.c.l.b16 %v1086
  %v1090 = vpack.c.b16 %v1089, %v1089
  %1091 = vrot.lane.b32.xlu0 %v1090, 96
  %v1092 = vpop.permute.xlu0 %1091
  %v1094 = vsel %vm52, %v1092, 0
  %1096 = vmatpush.bf16.msra.mxu0 0
  %1097 = vmatpush.bf16.msra.mxu0 0
  %1098 = vmatpush.bf16.msra.mxu0 0
  %1099 = vmatpush.bf16.msra.mxu0 0
  %1100 = vmatpush.bf16.msra.mxu0 0
  %1101 = vmatpush.bf16.msra.mxu0 0
  %1102 = vmatpush.bf16.msra.mxu0 %v49
  %1103 = vmatpush.bf16.msra.mxu0 %v48
  %1104 = vmatmul.bf16.gmra.mxu0 %v1094
  %v1105 = vpop.f32.mrf.mxu0
  %v1106 = vadd.f32 0.0, %v1105
  %v1107 = vpop.f32.mrf.mxu0
  %1108 = vdwg.mxu0
  %v1110 = vunpack.c.l.b16 %v1087
  %v1111 = vpack.c.b16 %v1110, %v1110
  %1112 = vrot.lane.b32.xlu0 %v1111, 96
  %v1113 = vpop.permute.xlu0 %1112
  %v1115 = vsel %vm52, %v1113, 0
  %1117 = vmatpush.bf16.msra.mxu0 0
  %1118 = vmatpush.bf16.msra.mxu0 0
  %1119 = vmatpush.bf16.msra.mxu0 0
  %1120 = vmatpush.bf16.msra.mxu0 0
  %1121 = vmatpush.bf16.msra.mxu0 0
  %1122 = vmatpush.bf16.msra.mxu0 0
  %1123 = vmatpush.bf16.msra.mxu0 %v78
  %1124 = vmatpush.bf16.msra.mxu0 %v77
  %1125 = vmatmul.bf16.gmra.mxu0 %v1115
  %v1126 = vpop.f32.mrf.mxu0
  %v1127 = vadd.f32 0.0, %v1126
  %v1128 = vpop.f32.mrf.mxu0
  %1129 = vdwg.mxu0
  %v1130 = vadd.f32 %v1084, %v1106
  %v1131 = vadd.f32 %v1085, %v1127
  %v1132 = vxor.u32 %v1130, 2147483648
  %v1133 = vxor.u32 %v1131, 2147483648
  %v1134 = vmul.f32 %v1132, 1.442695
  %v1135 = vpow.pop %v1134
  %v1136 = vmul.f32 %v1133, 1.442695
  %v1137 = vpow.pop %v1136
  %v1138 = vadd.f32 %v1135, 1.0
  %v1139 = vadd.f32 %v1137, 1.0
  %v1140 = vrcp.pop %v1138
  %v1141 = vmul.f32 %v1138, %v1140
  %v1142 = vsub.f32 1.0, %v1141
  %v1143 = vmul.f32 %v1140, %v1142
  %v1144 = vadd.f32 %v1140, %v1143
  %vm1145 = vweird.f32 %v1138
  %vm1146 = vweird.f32 %v1140
  %vm1147 = vmor %vm1145, %vm1146
  %v1148 = vsel %vm1147, %v1140, %v1144
  %v1149 = vand.u32 2147483647, %v1138
  %vm1150 = vcmp.eq.f32.partialorder %v1149, 8.507059e+37
  %v1151 = vand.u32 %v1138, 2147483648
  %v1152 = vor.u32 1.1754944e-38, %v1151
  %v1153 = vsel %vm1150, %v1152, %v1148
  %v1154 = vmul.f32 1.0, %v1153
  %v1155 = vrcp.pop %v1139
  %v1156 = vmul.f32 %v1139, %v1155
  %v1157 = vsub.f32 1.0, %v1156
  %v1158 = vmul.f32 %v1155, %v1157
  %v1159 = vadd.f32 %v1155, %v1158
  %vm1160 = vweird.f32 %v1139
  %vm1161 = vweird.f32 %v1155
  %vm1162 = vmor %vm1160, %vm1161
  %v1163 = vsel %vm1162, %v1155, %v1159
  %v1164 = vand.u32 2147483647, %v1139
  %vm1165 = vcmp.eq.f32.partialorder %v1164, 8.507059e+37
  %v1166 = vand.u32 %v1139, 2147483648
  %v1167 = vor.u32 1.1754944e-38, %v1166
  %v1168 = vsel %vm1165, %v1167, %v1163
  %v1169 = vmul.f32 1.0, %v1168
  %v1170 = vadd.f32 %v1106, %v142
  %v1171 = vadd.f32 %v1127, %v144
  %1174 = vrot.lane.b32.xlu0 %v1170, 64
  %v1175 = vpop.permute.xlu0 %1174
  %1176 = vrot.lane.b32.xlu0 %v1171, 64
  %v1177 = vpop.permute.xlu0 %1176
  %v1180 = vmul.f32 %v1154, %v1175
  %v1181 = vmul.f32 %v1169, %v1177
  %1184 = vrot.lane.b32.xlu0 %v1180, 64
  %v1185 = vpop.permute.xlu0 %1184
  %1186 = vrot.lane.b32.xlu0 %v1181, 64
  %v1187 = vpop.permute.xlu0 %1186
  %v1190 = vadd.f32 %v1084, %v1185
  %v1191 = vadd.f32 %v1085, %v1187
  %v1192 = vtanh.pop %v1190
  %v1193 = vtanh.pop %v1191
  %v1194 = vsub.f32 1.0, %v1154
  %v1195 = vsub.f32 1.0, %v1169
  %1198 = vrot.lane.b32.xlu0 %v1192, 96
  %v1199 = vpop.permute.xlu0 %1198
  %1200 = vrot.lane.b32.xlu0 %v1193, 96
  %v1201 = vpop.permute.xlu0 %1200
  %v1204 = vmul.f32 %v1194, %v1199
  %v1205 = vmul.f32 %v1195, %v1201
  %v1206 = vmul.f32 %v1154, %v1063
  %v1207 = vmul.f32 %v1169, %v1064
  %v1208 = vadd.f32 %v1204, %v1206
  %v1209 = vadd.f32 %v1205, %v1207
  %1212 = vst [vmem:[#allocation1] ss:$4 sm:$0xff] %v1208
  %v1213 = vld.sshfl [vmem:[#allocation1] sm:$0xff pattern:$0x73625140]
  %s1214 = scalar_lea.vmem [#allocation1], 32
  %1215 = vst [vmem:[%s1214] ss:$4 sm:$0xff] %v1209
  %v1216 = vld.sshfl [vmem:[#allocation1 + $0x20] sm:$0xff pattern:$0x73625140]
  %1217 = vrot.lane.b32.xlu0 %v1213, 96
  %v1218 = vpop.permute.xlu0 %1217
  %1219 = vrot.lane.b32.xlu0 %v1216, 96
  %v1220 = vpop.permute.xlu0 %1219
  %s1223 = scalar_lea.vmem %s3, 28
  %1224 = vst.msk [vmem:[%s1223] sm:$0x3] %vm208, %v1218
  %1225 = vst.msk [vmem:[%s1223 + $0x2] sm:$0x3] %vm208, %v1220
  %1226 = vst [vmem:[#allocation1] ss:$4 sm:$0xff] %v1208
  %v1227 = vld.sshfl [vmem:[#allocation1] sm:$0xff pattern:$0x73625140]
  %s1228 = scalar_lea.vmem [#allocation1], 32
  %1229 = vst [vmem:[%s1228] ss:$4 sm:$0xff] %v1209
  %v1230 = vld.sshfl [vmem:[#allocation1 + $0x20] sm:$0xff pattern:$0x73625140]
  %1231 = vrot.lane.b32.xlu0 %v1227, 96
  %v1232 = vpop.permute.xlu0 %1231
  %1233 = vrot.lane.b32.xlu0 %v1230, 96
  %v1234 = vpop.permute.xlu0 %1233
  %1237 = vst.msk [vmem:[#allocation2] sm:$0x3] %vm208, %v1232
  %1238 = vst.msk [vmem:[#allocation2 + $0x2] sm:$0x3] %vm208, %v1234
  // Predicated region
  $region18: #{encoder_forward.1} parent=0 // pred_check
    _
  $region19: #{encoder_forward.1} parent=0 // pred_check_branch
    %1240 = sbr.rel (0) target = $region21
  $region20: #{encoder_forward.1} parent=0 // pred_region
    _
  $region21: #{encoder_forward.1} parent=0 // pred_fallthru
    _
  // Predicated region
  $region22: #{encoder_forward.1} parent=0 // pred_check
    _
  $region23: #{encoder_forward.1} parent=0 // pred_check_branch
    %1242 = sbr.rel (0) target = $region25
  $region24: #{encoder_forward.1} parent=0 // pred_region
    _
  $region25: #{encoder_forward.1} parent=0 // pred_fallthru
    _

</llo_original>
